<compile_context>
chip_gen: v7x
topology: tpu7x:2x2x1
jax: 0.10.0
libtpu: 0.0.40
codegen_flags: <defaults>
</compile_context>

<pallas_src>
import functools
import math

import numpy as np

import jax
import jax.numpy as jnp
from jax import lax
from jax.experimental import pallas as pl
from jax.experimental.pallas import tpu as pltpu


# ------------------------------ fused kernel ------------------------------- #

def _fused_cnn_kernel(*refs, y_cfg, n_cfg, d_index):
    """One batch tile (R = Btile*Lp rows) of the whole forward pass.

    refs layout (in order):
      mask_ref (n_d, R, 1),
      y_ref (R, Cy0), n_ref (R, Cn0),
      [wy_i (K,Cin,Cout), by_i (1,Cout)] * len(y_cfg),
      [wn_i (K,Cin,Cout), bn_i (1,Cout)] * len(n_cfg),
      wfy (1, Cy_last), wfn (1, Cn_last), bf (1, 1),
      o_ref (1, 1, R)
    """
    ny, nn_ = len(y_cfg), len(n_cfg)
    it = iter(refs)
    mask_ref = next(it)
    y_ref = next(it)
    n_ref = next(it)
    y_layers = [(next(it), next(it)) for _ in range(ny)]
    n_layers = [(next(it), next(it)) for _ in range(nn_)]
    wfy_ref = next(it)
    wfn_ref = next(it)
    bf_ref = next(it)
    o_ref = next(it)

    R = y_ref.shape[0]
    # Per-offset boundary masks, loaded once (hoisted out of all layer loops).
    masks = {d: mask_ref[idx] for d, idx in d_index}            # each (R, 1)

    def shifted(x, d):
        # y[r] = x[r + d] if row r+d lies in the same sequence (and within the
        # true length L), else 0 -- realises 'same' zero padding and prevents
        # cross-batch / padding-row bleed.  Roll is an XLU sublane rotate.
        if d == 0:
            return x
        rolled = pltpu.roll(x, shift=(-d) % R, axis=0)
        return rolled * masks[d]

    def branch(x_ref, layers, cfg):
        cur = x_ref[...]                                        # (R, Cin) f32
        for (w_ref, b_ref), (K, cin, cout) in zip(layers, cfg):
            left = (K - 1) // 2
            acc = None
            for k in range(K):                                  # static tap unroll
                t = jnp.dot(shifted(cur, k - left), w_ref[k],
                            preferred_element_type=jnp.float32)
                acc = t if acc is None else acc + t
            cur = jnp.maximum(acc + b_ref[...], 0.0)            # bias + fused ReLU
        return cur

    y = branch(y_ref, y_layers, y_cfg)                          # (R, Cy_last)
    n = branch(n_ref, n_layers, n_cfg)                          # (R, Cn_last)

    # Final 1x1 conv over the (virtual) channel concat, emitted lane-dense as
    # one (1, R) row:  out[0, r] = wfy . y[r, :] + wfn . n[r, :] + bf
    contract = (((1,), (1,)), ((), ()))
    out = (lax.dot_general(wfy_ref[...], y, contract,
                           preferred_element_type=jnp.float32)
           + lax.dot_general(wfn_ref[...], n, contract,
                             preferred_element_type=jnp.float32)
           + bf_ref[...])
    o_ref[0] = out.astype(o_ref.dtype)


# ------------------------------ model wrapper ------------------------------ #

def ep_allmer_cnn_forward(params, Y_ji, N_ji, *, rows_per_tile=512):
    """Y_ji: (B, L, num_ep_features), N_ji: (B, L, num_seq_features) -> (B, L)."""
    B, L, Cy0 = Y_ji.shape
    _, Ln, Cn0 = N_ji.shape
    assert Ln == L

    def layer_cfg(convs):
        # PyTorch Conv1d weight (Cout, Cin, K) -> (K, Cin, Cout)
        return tuple((int(w.shape[2]), int(w.shape[1]), int(w.shape[0]))
                     for w, _ in convs)

    y_cfg = layer_cfg(params["y_convs"])
    n_cfg = layer_cfg(params["n_convs"])
    cy_last, cn_last = y_cfg[-1][2], n_cfg[-1][2]

    # ---- batch / sequence tiling -------------------------------------------
    Lp = ((L + 7) // 8) * 8                          # sublane-aligned sequence
    Btile = max(1, min(B, max(1, rows_per_tile // Lp)))
    num_tiles = (B + Btile - 1) // Btile             # >=2 steps shard v7x 2 TCs
    B_pad = num_tiles * Btile
    R = Btile * Lp                                   # matmul rows per grid step

    def prep(x):
        pad_b, pad_l = B_pad - x.shape[0], Lp - L
        if pad_b or pad_l:
            x = jnp.pad(x, ((0, pad_b), (0, pad_l), (0, 0)))
        return x.reshape(B_pad * Lp, x.shape[-1]).astype(jnp.float32)

    Y2, N2 = prep(Y_ji), prep(N_ji)

    # ---- per-offset boundary masks (static, built host-side with numpy) ----
    offsets = sorted({k - (K - 1) // 2
                      for (K, _, _) in y_cfg + n_cfg
                      for k in range(K)} - {0})
    pos = np.arange(R) % Lp
    if offsets:
        masks_np = np.stack([((pos + d >= 0) & (pos + d < L)).astype(np.float32)
                             for d in offsets])
    else:
        masks_np = np.ones((1, R), np.float32)       # dummy, never read
    masks = jnp.asarray(masks_np.reshape(masks_np.shape[0], R, 1))
    d_index = tuple((d, i) for i, d in enumerate(offsets))

    # ---- kernel inputs & BlockSpecs ----------------------------------------
    inputs = [masks, Y2, N2]
    in_specs = [
        pl.BlockSpec(masks.shape, lambda i: (0, 0, 0)),
        pl.BlockSpec((R, Cy0), lambda i: (i, 0)),
        pl.BlockSpec((R, Cn0), lambda i: (i, 0)),
    ]

    def add_layers(convs, cfg):
        for (w, b), (K, cin, cout) in zip(convs, cfg):
            inputs.append(jnp.transpose(w, (2, 1, 0)).astype(jnp.float32))
            inputs.append(b.reshape(1, cout).astype(jnp.float32))
            in_specs.append(pl.BlockSpec((K, cin, cout), lambda i: (0, 0, 0)))
            in_specs.append(pl.BlockSpec((1, cout), lambda i: (0, 0)))

    add_layers(params["y_convs"], y_cfg)
    add_layers(params["n_convs"], n_cfg)

    wf, bf = params["final"]                 # wf: (1, Cy+Cn, 1), bf: (1,)
    wf2 = wf[:, :, 0].astype(jnp.float32)    # split y/n parts: never concat x
    inputs += [wf2[:, :cy_last], wf2[:, cy_last:],
               bf.reshape(1, 1).astype(jnp.float32)]
    in_specs += [pl.BlockSpec((1, cy_last), lambda i: (0, 0)),
                 pl.BlockSpec((1, cn_last), lambda i: (0, 0)),
                 pl.BlockSpec((1, 1), lambda i: (0, 0))]

    # Advisory cost estimate so XLA schedules the fused call sensibly.
    flops = sum(2 * B_pad * Lp * K * cin * cout for (K, cin, cout) in y_cfg + n_cfg)
    flops += 2 * B_pad * Lp * (cy_last + cn_last)
    bytes_accessed = 4 * (int(Y2.size) + int(N2.size) + B_pad * Lp + int(masks.size))
    bytes_accessed += 4 * sum(int(w.size) + int(b.size)
                              for w, b in params["y_convs"] + params["n_convs"])
    bytes_accessed += 4 * (int(wf.size) + int(bf.size))

    kernel = functools.partial(_fused_cnn_kernel,
                               y_cfg=y_cfg, n_cfg=n_cfg, d_index=d_index)

    out = pl.pallas_call(
        kernel,
        out_shape=jax.ShapeDtypeStruct((num_tiles, 1, R), jnp.float32),
        grid_spec=pltpu.PrefetchScalarGridSpec(
            num_scalar_prefetch=0,
            grid=(num_tiles,),
            in_specs=in_specs,
            out_specs=pl.BlockSpec((1, 1, R), lambda i: (i, 0, 0))),
        compiler_params=pltpu.CompilerParams(
            dimension_semantics=("parallel",)),
        cost_estimate=pl.CostEstimate(
            flops=flops, transcendentals=0, bytes_accessed=bytes_accessed),
    )(*inputs)

    # (num_tiles, 1, Btile*Lp) -> (B_pad, Lp) -> crop batch/sequence padding.
    return out.reshape(B_pad, Lp)[:B, :L]


# ------------------------------- parameters -------------------------------- #

def init_params(key, num_ep_features, num_seq_features,
                y_channels, y_kernel_sizes, n_channels, n_kernel_sizes):
    """Deterministic PyTorch-style (uniform +-1/sqrt(fan_in*K)) init."""
    params = {"y_convs": [], "n_convs": []}

    def conv_init(key, cin, cout, k):
        kw, kb = jax.random.split(key)
        bound = 1.0 / math.sqrt(cin * k)
        w = jax.random.uniform(kw, (cout, cin, k), jnp.float32, -bound, bound)
        b = jax.random.uniform(kb, (cout,), jnp.float32, -bound, bound)
        return w, b

    cin = num_ep_features
    for cout, k in zip(y_channels, y_kernel_sizes):
        key, sub = jax.random.split(key)
        params["y_convs"].append(conv_init(sub, cin, cout, k))
        cin = cout

    cin = num_seq_features
    for cout, k in zip(n_channels, n_kernel_sizes):
        key, sub = jax.random.split(key)
        params["n_convs"].append(conv_init(sub, cin, cout, k))
        cin = cout

    key, sub = jax.random.split(key)
    params["final"] = conv_init(sub, y_channels[-1] + n_channels[-1], 1, 1)
    return params


# --------------------------- pure-JAX reference ---------------------------- #

def _ref_conv1d_same(x, w_torch, b):
    K = w_torch.shape[-1]
    total = K - 1
    left = total // 2
    xp = jnp.pad(x, ((0, 0), (left, total - left), (0, 0)))
    out = lax.conv_general_dilated(
        xp, w_torch, window_strides=(1,), padding="VALID",
        dimension_numbers=("NWC", "OIW", "NWC"))
    return out + b[None, None, :]


def ref_forward(params, Y_ji, N_ji):
    y = Y_ji
    for w, b in params["y_convs"]:
        y = jnp.maximum(_ref_conv1d_same(y, w, b), 0.0)
    n = N_ji
    for w, b in params["n_convs"]:
        n = jnp.maximum(_ref_conv1d_same(n, w, b), 0.0)
    x = jnp.concatenate([y, n], axis=-1)
    wf, bf = params["final"]
    return _ref_conv1d_same(x, wf, bf)[..., 0]


# ---------------------------------- main ----------------------------------- #

if __name__ == "__main__":
    # Small, module-consistent shapes.
    B, L = 2, 16
    num_ep_features, num_seq_features = 4, 4
    y_channels, y_kernel_sizes = [8, 16], [3, 5]
    n_channels, n_kernel_sizes = [8, 16], [3, 3]

    key = jax.random.PRNGKey(0)
    kp, ky, kn = jax.random.split(key, 3)

    params = init_params(kp, num_ep_features, num_seq_features,
                         y_channels, y_kernel_sizes,
                         n_channels, n_kernel_sizes)
    Y_ji = jax.random.normal(ky, (B, L, num_ep_features), jnp.float32)
    N_ji = jax.random.normal(kn, (B, L, num_seq_features), jnp.float32)

    out = jax.block_until_ready(ep_allmer_cnn_forward(params, Y_ji, N_ji))
    ref = jax.block_until_ready(ref_forward(params, Y_ji, N_ji))

    assert out.shape == (B, L), out.shape
    assert jnp.allclose(out, ref, atol=1e-4, rtol=1e-3), (
        float(jnp.max(jnp.abs(out - ref))))

    print("KERNEL_OK")
</pallas_src>

<mosaic_0001>
module attributes {stable_mosaic.version = 11 : i64} {
  func.func @_fused_cnn_kernel(%arg0: i32, %arg1: memref<4x32x1xf32, #tpu.memory_space<vmem>>, %arg2: memref<32x4xf32, #tpu.memory_space<vmem>>, %arg3: memref<32x4xf32, #tpu.memory_space<vmem>>, %arg4: memref<3x4x8xf32, #tpu.memory_space<vmem>>, %arg5: memref<1x8xf32, #tpu.memory_space<vmem>>, %arg6: memref<5x8x16xf32, #tpu.memory_space<vmem>>, %arg7: memref<1x16xf32, #tpu.memory_space<vmem>>, %arg8: memref<3x4x8xf32, #tpu.memory_space<vmem>>, %arg9: memref<1x8xf32, #tpu.memory_space<vmem>>, %arg10: memref<3x8x16xf32, #tpu.memory_space<vmem>>, %arg11: memref<1x16xf32, #tpu.memory_space<vmem>>, %arg12: memref<1x16xf32, #tpu.memory_space<vmem>>, %arg13: memref<1x16xf32, #tpu.memory_space<vmem>>, %arg14: memref<1x1xf32, #tpu.memory_space<vmem>>, %arg15: memref<1x1x32xf32, #tpu.memory_space<vmem>>) attributes {dimension_semantics = [#tpu.dimension_semantics<parallel>], iteration_bounds = array<i64: 1>, scalar_prefetch = 0 : i64, scratch_operands = 0 : i64, tpu.core_type = #tpu.core_type<tc>, window_params = [{pipeline_mode = #tpu.pipeline_mode<synchronous>, transform_indices = @transform_0, window_bounds = array<i64: 4, 32, 1>}, {transform_indices = @transform_1, window_bounds = array<i64: 32, 4>}, {transform_indices = @transform_2, window_bounds = array<i64: 32, 4>}, {pipeline_mode = #tpu.pipeline_mode<synchronous>, transform_indices = @transform_3, window_bounds = array<i64: 3, 4, 8>}, {pipeline_mode = #tpu.pipeline_mode<synchronous>, transform_indices = @transform_4, window_bounds = array<i64: 1, 8>}, {pipeline_mode = #tpu.pipeline_mode<synchronous>, transform_indices = @transform_5, window_bounds = array<i64: 5, 8, 16>}, {pipeline_mode = #tpu.pipeline_mode<synchronous>, transform_indices = @transform_6, window_bounds = array<i64: 1, 16>}, {pipeline_mode = #tpu.pipeline_mode<synchronous>, transform_indices = @transform_7, window_bounds = array<i64: 3, 4, 8>}, {pipeline_mode = #tpu.pipeline_mode<synchronous>, transform_indices = @transform_8, window_bounds = array<i64: 1, 8>}, {pipeline_mode = #tpu.pipeline_mode<synchronous>, transform_indices = @transform_9, window_bounds = array<i64: 3, 8, 16>}, {pipeline_mode = #tpu.pipeline_mode<synchronous>, transform_indices = @transform_10, window_bounds = array<i64: 1, 16>}, {pipeline_mode = #tpu.pipeline_mode<synchronous>, transform_indices = @transform_11, window_bounds = array<i64: 1, 16>}, {pipeline_mode = #tpu.pipeline_mode<synchronous>, transform_indices = @transform_12, window_bounds = array<i64: 1, 16>}, {pipeline_mode = #tpu.pipeline_mode<synchronous>, transform_indices = @transform_13, window_bounds = array<i64: 1, 1>}, {transform_indices = @transform_14, window_bounds = array<i64: 1, 1, 32>}]} {
    %c0 = arith.constant 0 : index
    %c0_0 = arith.constant 0 : index
    %c0_1 = arith.constant 0 : index
    %0 = vector.load %arg1[%c0, %c0_0, %c0_1] : memref<4x32x1xf32, #tpu.memory_space<vmem>>, vector<1x32x1xf32>
    %1 = vector.shape_cast %0 : vector<1x32x1xf32> to vector<32x1xf32>
    %c1 = arith.constant 1 : index
    %c0_2 = arith.constant 0 : index
    %c0_3 = arith.constant 0 : index
    %2 = vector.load %arg1[%c1, %c0_2, %c0_3] : memref<4x32x1xf32, #tpu.memory_space<vmem>>, vector<1x32x1xf32>
    %3 = vector.shape_cast %2 : vector<1x32x1xf32> to vector<32x1xf32>
    %c2 = arith.constant 2 : index
    %c0_4 = arith.constant 0 : index
    %c0_5 = arith.constant 0 : index
    %4 = vector.load %arg1[%c2, %c0_4, %c0_5] : memref<4x32x1xf32, #tpu.memory_space<vmem>>, vector<1x32x1xf32>
    %5 = vector.shape_cast %4 : vector<1x32x1xf32> to vector<32x1xf32>
    %c3 = arith.constant 3 : index
    %c0_6 = arith.constant 0 : index
    %c0_7 = arith.constant 0 : index
    %6 = vector.load %arg1[%c3, %c0_6, %c0_7] : memref<4x32x1xf32, #tpu.memory_space<vmem>>, vector<1x32x1xf32>
    %7 = vector.shape_cast %6 : vector<1x32x1xf32> to vector<32x1xf32>
    %c0_8 = arith.constant 0 : index
    %c0_9 = arith.constant 0 : index
    %8 = vector.load %arg2[%c0_8, %c0_9] : memref<32x4xf32, #tpu.memory_space<vmem>>, vector<32x4xf32>
    %c1_i32 = arith.constant 1 : i32
    %9 = tpu.dynamic_rotate %8 by %c1_i32 dim 0 : vector<32x4xf32>, i32 -> vector<32x4xf32>
    %10 = vector.broadcast %3 : vector<32x1xf32> to vector<32x4xf32>
    %11 = arith.mulf %9, %10 : vector<32x4xf32>
    %c0_10 = arith.constant 0 : index
    %c0_11 = arith.constant 0 : index
    %c0_12 = arith.constant 0 : index
    %12 = vector.load %arg4[%c0_10, %c0_11, %c0_12] : memref<3x4x8xf32, #tpu.memory_space<vmem>>, vector<1x4x8xf32>
    %13 = vector.shape_cast %12 : vector<1x4x8xf32> to vector<4x8xf32>
    %cst = arith.constant dense<0.000000e+00> : vector<32x8xf32>
    %14 = tpu.matmul %11, %13, %cst {dimension_numbers = #tpu.dot_dimension_numbers<[1], [0], [0], [1], [0, 0, 1, 1], [], []>} : vector<32x4xf32>, vector<4x8xf32>, vector<32x8xf32> -> vector<32x8xf32>
    %c1_13 = arith.constant 1 : index
    %c0_14 = arith.constant 0 : index
    %c0_15 = arith.constant 0 : index
    %15 = vector.load %arg4[%c1_13, %c0_14, %c0_15] : memref<3x4x8xf32, #tpu.memory_space<vmem>>, vector<1x4x8xf32>
    %16 = vector.shape_cast %15 : vector<1x4x8xf32> to vector<4x8xf32>
    %cst_16 = arith.constant dense<0.000000e+00> : vector<32x8xf32>
    %17 = tpu.matmul %8, %16, %cst_16 {dimension_numbers = #tpu.dot_dimension_numbers<[1], [0], [0], [1], [0, 0, 1, 1], [], []>} : vector<32x4xf32>, vector<4x8xf32>, vector<32x8xf32> -> vector<32x8xf32>
    %18 = arith.addf %14, %17 : vector<32x8xf32>
    %c31_i32 = arith.constant 31 : i32
    %19 = tpu.dynamic_rotate %8 by %c31_i32 dim 0 : vector<32x4xf32>, i32 -> vector<32x4xf32>
    %20 = vector.broadcast %5 : vector<32x1xf32> to vector<32x4xf32>
    %21 = arith.mulf %19, %20 : vector<32x4xf32>
    %c2_17 = arith.constant 2 : index
    %c0_18 = arith.constant 0 : index
    %c0_19 = arith.constant 0 : index
    %22 = vector.load %arg4[%c2_17, %c0_18, %c0_19] : memref<3x4x8xf32, #tpu.memory_space<vmem>>, vector<1x4x8xf32>
    %23 = vector.shape_cast %22 : vector<1x4x8xf32> to vector<4x8xf32>
    %cst_20 = arith.constant dense<0.000000e+00> : vector<32x8xf32>
    %24 = tpu.matmul %21, %23, %cst_20 {dimension_numbers = #tpu.dot_dimension_numbers<[1], [0], [0], [1], [0, 0, 1, 1], [], []>} : vector<32x4xf32>, vector<4x8xf32>, vector<32x8xf32> -> vector<32x8xf32>
    %25 = arith.addf %18, %24 : vector<32x8xf32>
    %c0_21 = arith.constant 0 : index
    %c0_22 = arith.constant 0 : index
    %26 = vector.load %arg5[%c0_21, %c0_22] : memref<1x8xf32, #tpu.memory_space<vmem>>, vector<1x8xf32>
    %27 = vector.broadcast %26 : vector<1x8xf32> to vector<32x8xf32>
    %28 = arith.addf %25, %27 : vector<32x8xf32>
    %cst_23 = arith.constant 0.000000e+00 : f32
    %29 = vector.broadcast %cst_23 : f32 to vector<32x8xf32>
    %30 = arith.maximumf %28, %29 : vector<32x8xf32>
    %c2_i32 = arith.constant 2 : i32
    %31 = tpu.dynamic_rotate %30 by %c2_i32 dim 0 : vector<32x8xf32>, i32 -> vector<32x8xf32>
    %32 = vector.broadcast %1 : vector<32x1xf32> to vector<32x8xf32>
    %33 = arith.mulf %31, %32 : vector<32x8xf32>
    %c0_24 = arith.constant 0 : index
    %c0_25 = arith.constant 0 : index
    %c0_26 = arith.constant 0 : index
    %34 = vector.load %arg6[%c0_24, %c0_25, %c0_26] : memref<5x8x16xf32, #tpu.memory_space<vmem>>, vector<1x8x16xf32>
    %35 = vector.shape_cast %34 : vector<1x8x16xf32> to vector<8x16xf32>
    %cst_27 = arith.constant dense<0.000000e+00> : vector<32x16xf32>
    %36 = tpu.matmul %33, %35, %cst_27 {dimension_numbers = #tpu.dot_dimension_numbers<[1], [0], [0], [1], [0, 0, 1, 1], [], []>} : vector<32x8xf32>, vector<8x16xf32>, vector<32x16xf32> -> vector<32x16xf32>
    %c1_i32_28 = arith.constant 1 : i32
    %37 = tpu.dynamic_rotate %30 by %c1_i32_28 dim 0 : vector<32x8xf32>, i32 -> vector<32x8xf32>
    %38 = vector.broadcast %3 : vector<32x1xf32> to vector<32x8xf32>
    %39 = arith.mulf %37, %38 : vector<32x8xf32>
    %c1_29 = arith.constant 1 : index
    %c0_30 = arith.constant 0 : index
    %c0_31 = arith.constant 0 : index
    %40 = vector.load %arg6[%c1_29, %c0_30, %c0_31] : memref<5x8x16xf32, #tpu.memory_space<vmem>>, vector<1x8x16xf32>
    %41 = vector.shape_cast %40 : vector<1x8x16xf32> to vector<8x16xf32>
    %cst_32 = arith.constant dense<0.000000e+00> : vector<32x16xf32>
    %42 = tpu.matmul %39, %41, %cst_32 {dimension_numbers = #tpu.dot_dimension_numbers<[1], [0], [0], [1], [0, 0, 1, 1], [], []>} : vector<32x8xf32>, vector<8x16xf32>, vector<32x16xf32> -> vector<32x16xf32>
    %43 = arith.addf %36, %42 : vector<32x16xf32>
    %c2_33 = arith.constant 2 : index
    %c0_34 = arith.constant 0 : index
    %c0_35 = arith.constant 0 : index
    %44 = vector.load %arg6[%c2_33, %c0_34, %c0_35] : memref<5x8x16xf32, #tpu.memory_space<vmem>>, vector<1x8x16xf32>
    %45 = vector.shape_cast %44 : vector<1x8x16xf32> to vector<8x16xf32>
    %cst_36 = arith.constant dense<0.000000e+00> : vector<32x16xf32>
    %46 = tpu.matmul %30, %45, %cst_36 {dimension_numbers = #tpu.dot_dimension_numbers<[1], [0], [0], [1], [0, 0, 1, 1], [], []>} : vector<32x8xf32>, vector<8x16xf32>, vector<32x16xf32> -> vector<32x16xf32>
    %47 = arith.addf %43, %46 : vector<32x16xf32>
    %c31_i32_37 = arith.constant 31 : i32
    %48 = tpu.dynamic_rotate %30 by %c31_i32_37 dim 0 : vector<32x8xf32>, i32 -> vector<32x8xf32>
    %49 = vector.broadcast %5 : vector<32x1xf32> to vector<32x8xf32>
    %50 = arith.mulf %48, %49 : vector<32x8xf32>
    %c3_38 = arith.constant 3 : index
    %c0_39 = arith.constant 0 : index
    %c0_40 = arith.constant 0 : index
    %51 = vector.load %arg6[%c3_38, %c0_39, %c0_40] : memref<5x8x16xf32, #tpu.memory_space<vmem>>, vector<1x8x16xf32>
    %52 = vector.shape_cast %51 : vector<1x8x16xf32> to vector<8x16xf32>
    %cst_41 = arith.constant dense<0.000000e+00> : vector<32x16xf32>
    %53 = tpu.matmul %50, %52, %cst_41 {dimension_numbers = #tpu.dot_dimension_numbers<[1], [0], [0], [1], [0, 0, 1, 1], [], []>} : vector<32x8xf32>, vector<8x16xf32>, vector<32x16xf32> -> vector<32x16xf32>
    %54 = arith.addf %47, %53 : vector<32x16xf32>
    %c30_i32 = arith.constant 30 : i32
    %55 = tpu.dynamic_rotate %30 by %c30_i32 dim 0 : vector<32x8xf32>, i32 -> vector<32x8xf32>
    %56 = vector.broadcast %7 : vector<32x1xf32> to vector<32x8xf32>
    %57 = arith.mulf %55, %56 : vector<32x8xf32>
    %c4 = arith.constant 4 : index
    %c0_42 = arith.constant 0 : index
    %c0_43 = arith.constant 0 : index
    %58 = vector.load %arg6[%c4, %c0_42, %c0_43] : memref<5x8x16xf32, #tpu.memory_space<vmem>>, vector<1x8x16xf32>
    %59 = vector.shape_cast %58 : vector<1x8x16xf32> to vector<8x16xf32>
    %cst_44 = arith.constant dense<0.000000e+00> : vector<32x16xf32>
    %60 = tpu.matmul %57, %59, %cst_44 {dimension_numbers = #tpu.dot_dimension_numbers<[1], [0], [0], [1], [0, 0, 1, 1], [], []>} : vector<32x8xf32>, vector<8x16xf32>, vector<32x16xf32> -> vector<32x16xf32>
    %61 = arith.addf %54, %60 : vector<32x16xf32>
    %c0_45 = arith.constant 0 : index
    %c0_46 = arith.constant 0 : index
    %62 = vector.load %arg7[%c0_45, %c0_46] : memref<1x16xf32, #tpu.memory_space<vmem>>, vector<1x16xf32>
    %63 = vector.broadcast %62 : vector<1x16xf32> to vector<32x16xf32>
    %64 = arith.addf %61, %63 : vector<32x16xf32>
    %cst_47 = arith.constant 0.000000e+00 : f32
    %65 = vector.broadcast %cst_47 : f32 to vector<32x16xf32>
    %66 = arith.maximumf %64, %65 : vector<32x16xf32>
    %c0_48 = arith.constant 0 : index
    %c0_49 = arith.constant 0 : index
    %67 = vector.load %arg3[%c0_48, %c0_49] : memref<32x4xf32, #tpu.memory_space<vmem>>, vector<32x4xf32>
    %c1_i32_50 = arith.constant 1 : i32
    %68 = tpu.dynamic_rotate %67 by %c1_i32_50 dim 0 : vector<32x4xf32>, i32 -> vector<32x4xf32>
    %69 = vector.broadcast %3 : vector<32x1xf32> to vector<32x4xf32>
    %70 = arith.mulf %68, %69 : vector<32x4xf32>
    %c0_51 = arith.constant 0 : index
    %c0_52 = arith.constant 0 : index
    %c0_53 = arith.constant 0 : index
    %71 = vector.load %arg8[%c0_51, %c0_52, %c0_53] : memref<3x4x8xf32, #tpu.memory_space<vmem>>, vector<1x4x8xf32>
    %72 = vector.shape_cast %71 : vector<1x4x8xf32> to vector<4x8xf32>
    %cst_54 = arith.constant dense<0.000000e+00> : vector<32x8xf32>
    %73 = tpu.matmul %70, %72, %cst_54 {dimension_numbers = #tpu.dot_dimension_numbers<[1], [0], [0], [1], [0, 0, 1, 1], [], []>} : vector<32x4xf32>, vector<4x8xf32>, vector<32x8xf32> -> vector<32x8xf32>
    %c1_55 = arith.constant 1 : index
    %c0_56 = arith.constant 0 : index
    %c0_57 = arith.constant 0 : index
    %74 = vector.load %arg8[%c1_55, %c0_56, %c0_57] : memref<3x4x8xf32, #tpu.memory_space<vmem>>, vector<1x4x8xf32>
    %75 = vector.shape_cast %74 : vector<1x4x8xf32> to vector<4x8xf32>
    %cst_58 = arith.constant dense<0.000000e+00> : vector<32x8xf32>
    %76 = tpu.matmul %67, %75, %cst_58 {dimension_numbers = #tpu.dot_dimension_numbers<[1], [0], [0], [1], [0, 0, 1, 1], [], []>} : vector<32x4xf32>, vector<4x8xf32>, vector<32x8xf32> -> vector<32x8xf32>
    %77 = arith.addf %73, %76 : vector<32x8xf32>
    %c31_i32_59 = arith.constant 31 : i32
    %78 = tpu.dynamic_rotate %67 by %c31_i32_59 dim 0 : vector<32x4xf32>, i32 -> vector<32x4xf32>
    %79 = vector.broadcast %5 : vector<32x1xf32> to vector<32x4xf32>
    %80 = arith.mulf %78, %79 : vector<32x4xf32>
    %c2_60 = arith.constant 2 : index
    %c0_61 = arith.constant 0 : index
    %c0_62 = arith.constant 0 : index
    %81 = vector.load %arg8[%c2_60, %c0_61, %c0_62] : memref<3x4x8xf32, #tpu.memory_space<vmem>>, vector<1x4x8xf32>
    %82 = vector.shape_cast %81 : vector<1x4x8xf32> to vector<4x8xf32>
    %cst_63 = arith.constant dense<0.000000e+00> : vector<32x8xf32>
    %83 = tpu.matmul %80, %82, %cst_63 {dimension_numbers = #tpu.dot_dimension_numbers<[1], [0], [0], [1], [0, 0, 1, 1], [], []>} : vector<32x4xf32>, vector<4x8xf32>, vector<32x8xf32> -> vector<32x8xf32>
    %84 = arith.addf %77, %83 : vector<32x8xf32>
    %c0_64 = arith.constant 0 : index
    %c0_65 = arith.constant 0 : index
    %85 = vector.load %arg9[%c0_64, %c0_65] : memref<1x8xf32, #tpu.memory_space<vmem>>, vector<1x8xf32>
    %86 = vector.broadcast %85 : vector<1x8xf32> to vector<32x8xf32>
    %87 = arith.addf %84, %86 : vector<32x8xf32>
    %cst_66 = arith.constant 0.000000e+00 : f32
    %88 = vector.broadcast %cst_66 : f32 to vector<32x8xf32>
    %89 = arith.maximumf %87, %88 : vector<32x8xf32>
    %c1_i32_67 = arith.constant 1 : i32
    %90 = tpu.dynamic_rotate %89 by %c1_i32_67 dim 0 : vector<32x8xf32>, i32 -> vector<32x8xf32>
    %91 = vector.broadcast %3 : vector<32x1xf32> to vector<32x8xf32>
    %92 = arith.mulf %90, %91 : vector<32x8xf32>
    %c0_68 = arith.constant 0 : index
    %c0_69 = arith.constant 0 : index
    %c0_70 = arith.constant 0 : index
    %93 = vector.load %arg10[%c0_68, %c0_69, %c0_70] : memref<3x8x16xf32, #tpu.memory_space<vmem>>, vector<1x8x16xf32>
    %94 = vector.shape_cast %93 : vector<1x8x16xf32> to vector<8x16xf32>
    %cst_71 = arith.constant dense<0.000000e+00> : vector<32x16xf32>
    %95 = tpu.matmul %92, %94, %cst_71 {dimension_numbers = #tpu.dot_dimension_numbers<[1], [0], [0], [1], [0, 0, 1, 1], [], []>} : vector<32x8xf32>, vector<8x16xf32>, vector<32x16xf32> -> vector<32x16xf32>
    %c1_72 = arith.constant 1 : index
    %c0_73 = arith.constant 0 : index
    %c0_74 = arith.constant 0 : index
    %96 = vector.load %arg10[%c1_72, %c0_73, %c0_74] : memref<3x8x16xf32, #tpu.memory_space<vmem>>, vector<1x8x16xf32>
    %97 = vector.shape_cast %96 : vector<1x8x16xf32> to vector<8x16xf32>
    %cst_75 = arith.constant dense<0.000000e+00> : vector<32x16xf32>
    %98 = tpu.matmul %89, %97, %cst_75 {dimension_numbers = #tpu.dot_dimension_numbers<[1], [0], [0], [1], [0, 0, 1, 1], [], []>} : vector<32x8xf32>, vector<8x16xf32>, vector<32x16xf32> -> vector<32x16xf32>
    %99 = arith.addf %95, %98 : vector<32x16xf32>
    %c31_i32_76 = arith.constant 31 : i32
    %100 = tpu.dynamic_rotate %89 by %c31_i32_76 dim 0 : vector<32x8xf32>, i32 -> vector<32x8xf32>
    %101 = vector.broadcast %5 : vector<32x1xf32> to vector<32x8xf32>
    %102 = arith.mulf %100, %101 : vector<32x8xf32>
    %c2_77 = arith.constant 2 : index
    %c0_78 = arith.constant 0 : index
    %c0_79 = arith.constant 0 : index
    %103 = vector.load %arg10[%c2_77, %c0_78, %c0_79] : memref<3x8x16xf32, #tpu.memory_space<vmem>>, vector<1x8x16xf32>
    %104 = vector.shape_cast %103 : vector<1x8x16xf32> to vector<8x16xf32>
    %cst_80 = arith.constant dense<0.000000e+00> : vector<32x16xf32>
    %105 = tpu.matmul %102, %104, %cst_80 {dimension_numbers = #tpu.dot_dimension_numbers<[1], [0], [0], [1], [0, 0, 1, 1], [], []>} : vector<32x8xf32>, vector<8x16xf32>, vector<32x16xf32> -> vector<32x16xf32>
    %106 = arith.addf %99, %105 : vector<32x16xf32>
    %c0_81 = arith.constant 0 : index
    %c0_82 = arith.constant 0 : index
    %107 = vector.load %arg11[%c0_81, %c0_82] : memref<1x16xf32, #tpu.memory_space<vmem>>, vector<1x16xf32>
    %108 = vector.broadcast %107 : vector<1x16xf32> to vector<32x16xf32>
    %109 = arith.addf %106, %108 : vector<32x16xf32>
    %cst_83 = arith.constant 0.000000e+00 : f32
    %110 = vector.broadcast %cst_83 : f32 to vector<32x16xf32>
    %111 = arith.maximumf %109, %110 : vector<32x16xf32>
    %c0_84 = arith.constant 0 : index
    %c0_85 = arith.constant 0 : index
    %112 = vector.load %arg12[%c0_84, %c0_85] : memref<1x16xf32, #tpu.memory_space<vmem>>, vector<1x16xf32>
    %cst_86 = arith.constant dense<0.000000e+00> : vector<1x32xf32>
    %113 = tpu.matmul %112, %66, %cst_86 {dimension_numbers = #tpu.dot_dimension_numbers<[1], [1], [0], [0], [0, 0, 1, 0], [], []>} : vector<1x16xf32>, vector<32x16xf32>, vector<1x32xf32> -> vector<1x32xf32>
    %c0_87 = arith.constant 0 : index
    %c0_88 = arith.constant 0 : index
    %114 = vector.load %arg13[%c0_87, %c0_88] : memref<1x16xf32, #tpu.memory_space<vmem>>, vector<1x16xf32>
    %cst_89 = arith.constant dense<0.000000e+00> : vector<1x32xf32>
    %115 = tpu.matmul %114, %111, %cst_89 {dimension_numbers = #tpu.dot_dimension_numbers<[1], [1], [0], [0], [0, 0, 1, 0], [], []>} : vector<1x16xf32>, vector<32x16xf32>, vector<1x32xf32> -> vector<1x32xf32>
    %116 = arith.addf %113, %115 : vector<1x32xf32>
    %c0_90 = arith.constant 0 : index
    %c0_91 = arith.constant 0 : index
    %117 = vector.load %arg14[%c0_90, %c0_91] : memref<1x1xf32, #tpu.memory_space<vmem>>, vector<1x1xf32>
    %118 = vector.broadcast %117 : vector<1x1xf32> to vector<1x32xf32>
    %119 = arith.addf %116, %118 : vector<1x32xf32>
    %c0_92 = arith.constant 0 : index
    %c0_93 = arith.constant 0 : index
    %c0_94 = arith.constant 0 : index
    %120 = vector.load %arg15[%c0_92, %c0_93, %c0_94] : memref<1x1x32xf32, #tpu.memory_space<vmem>>, vector<1x1x32xf32>
    %121 = vector.shape_cast %120 : vector<1x1x32xf32> to vector<1x32xf32>
    %122 = vector.shape_cast %119 : vector<1x32xf32> to vector<1x1x32xf32>
    tpu.vector_store %arg15[%c0_92, %c0_93, %c0_94], %122 {strides = array<i32>} : memref<1x1x32xf32, #tpu.memory_space<vmem>>, vector<1x1x32xf32>,
    return
  }
  func.func @transform_0(%arg0: i32) -> (i32, i32, i32) {
    %c0_i32 = arith.constant 0 : i32
    %c0_i32_0 = arith.constant 0 : i32
    %c0_i32_1 = arith.constant 0 : i32
    %c0_i32_2 = arith.constant 0 : i32
    return %c0_i32, %c0_i32_0, %c0_i32_1 : i32, i32, i32
  }
  func.func @transform_1(%arg0: i32) -> (i32, i32) {
    %c0_i32 = arith.constant 0 : i32
    %c0_i32_0 = arith.constant 0 : i32
    return %arg0, %c0_i32 : i32, i32
  }
  func.func @transform_2(%arg0: i32) -> (i32, i32) {
    %c0_i32 = arith.constant 0 : i32
    %c0_i32_0 = arith.constant 0 : i32
    return %arg0, %c0_i32 : i32, i32
  }
  func.func @transform_3(%arg0: i32) -> (i32, i32, i32) {
    %c0_i32 = arith.constant 0 : i32
    %c0_i32_0 = arith.constant 0 : i32
    %c0_i32_1 = arith.constant 0 : i32
    %c0_i32_2 = arith.constant 0 : i32
    return %c0_i32, %c0_i32_0, %c0_i32_1 : i32, i32, i32
  }
  func.func @transform_4(%arg0: i32) -> (i32, i32) {
    %c0_i32 = arith.constant 0 : i32
    %c0_i32_0 = arith.constant 0 : i32
    %c0_i32_1 = arith.constant 0 : i32
    return %c0_i32, %c0_i32_0 : i32, i32
  }
  func.func @transform_5(%arg0: i32) -> (i32, i32, i32) {
    %c0_i32 = arith.constant 0 : i32
    %c0_i32_0 = arith.constant 0 : i32
    %c0_i32_1 = arith.constant 0 : i32
    %c0_i32_2 = arith.constant 0 : i32
    return %c0_i32, %c0_i32_0, %c0_i32_1 : i32, i32, i32
  }
  func.func @transform_6(%arg0: i32) -> (i32, i32) {
    %c0_i32 = arith.constant 0 : i32
    %c0_i32_0 = arith.constant 0 : i32
    %c0_i32_1 = arith.constant 0 : i32
    return %c0_i32, %c0_i32_0 : i32, i32
  }
  func.func @transform_7(%arg0: i32) -> (i32, i32, i32) {
    %c0_i32 = arith.constant 0 : i32
    %c0_i32_0 = arith.constant 0 : i32
    %c0_i32_1 = arith.constant 0 : i32
    %c0_i32_2 = arith.constant 0 : i32
    return %c0_i32, %c0_i32_0, %c0_i32_1 : i32, i32, i32
  }
  func.func @transform_8(%arg0: i32) -> (i32, i32) {
    %c0_i32 = arith.constant 0 : i32
    %c0_i32_0 = arith.constant 0 : i32
    %c0_i32_1 = arith.constant 0 : i32
    return %c0_i32, %c0_i32_0 : i32, i32
  }
  func.func @transform_9(%arg0: i32) -> (i32, i32, i32) {
    %c0_i32 = arith.constant 0 : i32
    %c0_i32_0 = arith.constant 0 : i32
    %c0_i32_1 = arith.constant 0 : i32
    %c0_i32_2 = arith.constant 0 : i32
    return %c0_i32, %c0_i32_0, %c0_i32_1 : i32, i32, i32
  }
  func.func @transform_10(%arg0: i32) -> (i32, i32) {
    %c0_i32 = arith.constant 0 : i32
    %c0_i32_0 = arith.constant 0 : i32
    %c0_i32_1 = arith.constant 0 : i32
    return %c0_i32, %c0_i32_0 : i32, i32
  }
  func.func @transform_11(%arg0: i32) -> (i32, i32) {
    %c0_i32 = arith.constant 0 : i32
    %c0_i32_0 = arith.constant 0 : i32
    %c0_i32_1 = arith.constant 0 : i32
    return %c0_i32, %c0_i32_0 : i32, i32
  }
  func.func @transform_12(%arg0: i32) -> (i32, i32) {
    %c0_i32 = arith.constant 0 : i32
    %c0_i32_0 = arith.constant 0 : i32
    %c0_i32_1 = arith.constant 0 : i32
    return %c0_i32, %c0_i32_0 : i32, i32
  }
  func.func @transform_13(%arg0: i32) -> (i32, i32) {
    %c0_i32 = arith.constant 0 : i32
    %c0_i32_0 = arith.constant 0 : i32
    %c0_i32_1 = arith.constant 0 : i32
    return %c0_i32, %c0_i32_0 : i32, i32
  }
  func.func @transform_14(%arg0: i32) -> (i32, i32, i32) {
    %c0_i32 = arith.constant 0 : i32
    %c0_i32_0 = arith.constant 0 : i32
    %c0_i32_1 = arith.constant 0 : i32
    return %arg0, %c0_i32, %c0_i32_0 : i32, i32, i32
  }
}

</mosaic_0001>

<llo_original>
// kernel: tpu_custom_call.1
$region0: #{tpu_custom_call.1}
  #allocation0 [shape = 'u32[]', space=smem, size = 0x4, offset = 0x4, fixed_abs, tag = 'smem constant byte address 0x4 - core index']
  #allocation1 [shape = 'u32[144,128]{1,0:T(1,128)}', space=vmem, size = 0x12000, scoped, tag = 'internal scratch']
  #allocation2 [shape = 'f32[1,1]{1,0:T(1,128)S(1)}', space=vmem, size = 0x200, scoped, tag = 'scoped memory for tpu_custom_call.1']
  %s0 = inlined_call_operand.vmem [shape: f32[4,32,1], index: 0, kind: input, shape index: {}]
  %s1 = inlined_call_operand.vmem [shape: f32[32,4], index: 1, kind: input, shape index: {}]
  %s2 = inlined_call_operand.vmem [shape: f32[32,4], index: 2, kind: input, shape index: {}]
  %s3 = inlined_call_operand.vmem [shape: f32[3,4,8], index: 3, kind: input, shape index: {}]
  %s4 = inlined_call_operand.vmem [shape: f32[1,8], index: 4, kind: input, shape index: {}]
  %s5 = inlined_call_operand.vmem [shape: f32[5,8,16], index: 5, kind: input, shape index: {}]
  %s6 = inlined_call_operand.vmem [shape: f32[1,16], index: 6, kind: input, shape index: {}]
  %s7 = inlined_call_operand.vmem [shape: f32[3,4,8], index: 7, kind: input, shape index: {}]
  %s8 = inlined_call_operand.vmem [shape: f32[1,8], index: 8, kind: input, shape index: {}]
  %s9 = inlined_call_operand.vmem [shape: f32[3,8,16], index: 9, kind: input, shape index: {}]
  %s10 = inlined_call_operand.vmem [shape: f32[1,16], index: 10, kind: input, shape index: {}]
  %s11 = inlined_call_operand.vmem [shape: f32[1,16], index: 11, kind: input, shape index: {}]
  %s12 = inlined_call_operand.vmem [shape: f32[1,16], index: 12, kind: input, shape index: {}]
  %s13 = inlined_call_operand.<no memory space> [shape: f32[1,1], index: 13, kind: input, shape index: {}]
  %s14 = inlined_call_operand.hbm [shape: f32[1,1,32], index: 14, kind: output, shape index: {}]
  %s15 = sld [smem:[#allocation0]]
  $region66: #{tpu_custom_call.1} parent=0
    _
  %s17 = ssub.s32 1, %s15
  %s18 = scalar_select 0, %s17, %s15
  %v19 = vstv %s13
  %20 = vst [vmem:[#allocation2] sm:$0x1] %v19
  $region1: #{tpu_custom_call.1} parent=0
    #allocation3 [shape = 'u8[512]{0}', space=vmem, size = 0x400, scoped, tag = 'output window, operand 0, single buffered']
    #allocation4 [shape = 's32[1]{0}', space=sflag, size = 0x4, scoped, tag = 'scoped memory for tpu_custom_call.1']
    %21 = vsyncpa [#allocation4], 0
    // Predicated region
    $region2: #{tpu_custom_call.1} parent=1 // pred_check
      _
    $region3: #{tpu_custom_call.1} parent=1 // pred_check_branch
      %23 = sbr.rel (0) target = $region5
    $region4: #{tpu_custom_call.1} parent=1 // pred_region
      _
    $region5: #{tpu_custom_call.1} parent=1 // pred_fallthru
      _
    // Predicated region
    $region6: #{tpu_custom_call.1} parent=1 // pred_check
      _
    $region7: #{tpu_custom_call.1} parent=1 // pred_check_branch
      %25 = sbr.rel (0) target = $region9
    $region8: #{tpu_custom_call.1} parent=1 // pred_region
      _
    $region9: #{tpu_custom_call.1} parent=1 // pred_fallthru
      _
    // Predicated region
    $region10: #{tpu_custom_call.1} parent=1 // pred_check
      _
    $region11: #{tpu_custom_call.1} parent=1 // pred_check_branch
      %27 = sbr.rel (0) target = $region13
    $region12: #{tpu_custom_call.1} parent=1 // pred_region
      _
    $region13: #{tpu_custom_call.1} parent=1 // pred_fallthru
      _
    // Predicated region
    $region14: #{tpu_custom_call.1} parent=1 // pred_check
      _
    $region15: #{tpu_custom_call.1} parent=1 // pred_check_branch
      %29 = sbr.rel (0) target = $region17
    $region16: #{tpu_custom_call.1} parent=1 // pred_region
      _
    $region17: #{tpu_custom_call.1} parent=1 // pred_fallthru
      _
    // Predicated region
    $region18: #{tpu_custom_call.1} parent=1 // pred_check
      _
    $region19: #{tpu_custom_call.1} parent=1 // pred_check_branch
      %31 = sbr.rel (0) target = $region21
    $region20: #{tpu_custom_call.1} parent=1 // pred_region
      _
    $region21: #{tpu_custom_call.1} parent=1 // pred_fallthru
      _
    // Predicated region
    $region22: #{tpu_custom_call.1} parent=1 // pred_check
      _
    $region23: #{tpu_custom_call.1} parent=1 // pred_check_branch
      %33 = sbr.rel (0) target = $region25
    $region24: #{tpu_custom_call.1} parent=1 // pred_region
      _
    $region25: #{tpu_custom_call.1} parent=1 // pred_fallthru
      _
    // Predicated region
    $region26: #{tpu_custom_call.1} parent=1 // pred_check
      _
    $region27: #{tpu_custom_call.1} parent=1 // pred_check_branch
      %35 = sbr.rel (0) target = $region29
    $region28: #{tpu_custom_call.1} parent=1 // pred_region
      _
    $region29: #{tpu_custom_call.1} parent=1 // pred_fallthru
      _
    // Predicated region
    $region30: #{tpu_custom_call.1} parent=1 // pred_check
      _
    $region31: #{tpu_custom_call.1} parent=1 // pred_check_branch
      %37 = sbr.rel (0) target = $region33
    $region32: #{tpu_custom_call.1} parent=1 // pred_region
      _
    $region33: #{tpu_custom_call.1} parent=1 // pred_fallthru
      _
    // Predicated region
    $region34: #{tpu_custom_call.1} parent=1 // pred_check
      _
    $region35: #{tpu_custom_call.1} parent=1 // pred_check_branch
      %39 = sbr.rel (0) target = $region37
    $region36: #{tpu_custom_call.1} parent=1 // pred_region
      _
    $region37: #{tpu_custom_call.1} parent=1 // pred_fallthru
      _
    // Predicated region
    $region38: #{tpu_custom_call.1} parent=1 // pred_check
      _
    $region39: #{tpu_custom_call.1} parent=1 // pred_check_branch
      %41 = sbr.rel (0) target = $region41
    $region40: #{tpu_custom_call.1} parent=1 // pred_region
      _
    $region41: #{tpu_custom_call.1} parent=1 // pred_fallthru
      _
    // Predicated region
    $region42: #{tpu_custom_call.1} parent=1 // pred_check
      _
    $region43: #{tpu_custom_call.1} parent=1 // pred_check_branch
      %43 = sbr.rel (0) target = $region45
    $region44: #{tpu_custom_call.1} parent=1 // pred_region
      _
    $region45: #{tpu_custom_call.1} parent=1 // pred_fallthru
      _
    // Predicated region
    $region46: #{tpu_custom_call.1} parent=1 // pred_check
      _
    $region47: #{tpu_custom_call.1} parent=1 // pred_check_branch
      %45 = sbr.rel (0) target = $region49
    $region48: #{tpu_custom_call.1} parent=1 // pred_region
      _
    $region49: #{tpu_custom_call.1} parent=1 // pred_fallthru
      _
    // Predicated region
    $region50: #{tpu_custom_call.1} parent=1 // pred_check
      _
    $region51: #{tpu_custom_call.1} parent=1 // pred_check_branch
      %47 = sbr.rel (0) target = $region53
    $region52: #{tpu_custom_call.1} parent=1 // pred_region
      _
    $region53: #{tpu_custom_call.1} parent=1 // pred_fallthru
      _
    // Predicated region
    $region54: #{tpu_custom_call.1} parent=1 // pred_check
      _
    $region55: #{tpu_custom_call.1} parent=1 // pred_check_branch
      %49 = sbr.rel (0) target = $region57
    $region56: #{tpu_custom_call.1} parent=1 // pred_region
      _
    $region57: #{tpu_custom_call.1} parent=1 // pred_fallthru
      _
    %v50 = vld [vmem:[%s0] sm:$0xff]
    %v51 = vld [vmem:[%s0 + $0x8] sm:$0xff]
    %v52 = vld [vmem:[%s0 + $0x10] sm:$0xff]
    %v53 = vld [vmem:[%s0 + $0x18] sm:$0xff]
    %s54 = scalar_lea.vmem %s0, 32
    %v55 = vld [vmem:[%s54] sm:$0xff]
    %v56 = vld [vmem:[%s54 + $0x8] sm:$0xff]
    %v57 = vld [vmem:[%s54 + $0x10] sm:$0xff]
    %v58 = vld [vmem:[%s54 + $0x18] sm:$0xff]
    %s59 = scalar_lea.vmem %s0, 64
    %v60 = vld [vmem:[%s59] sm:$0xff]
    %v61 = vld [vmem:[%s59 + $0x8] sm:$0xff]
    %v62 = vld [vmem:[%s59 + $0x10] sm:$0xff]
    %v63 = vld [vmem:[%s59 + $0x18] sm:$0xff]
    %s64 = scalar_lea.vmem %s0, 96
    %v65 = vld [vmem:[%s64] sm:$0xff]
    %v66 = vld [vmem:[%s64 + $0x8] sm:$0xff]
    %v67 = vld [vmem:[%s64 + $0x10] sm:$0xff]
    %v68 = vld [vmem:[%s64 + $0x18] sm:$0xff]
    %v69 = vld [vmem:[%s1] sm:$0xff]
    %v70 = vld [vmem:[%s1 + $0x8] sm:$0xff]
    %v71 = vld [vmem:[%s1 + $0x10] sm:$0xff]
    %v72 = vld [vmem:[%s1 + $0x18] sm:$0xff]
    %v73 = vrot.slane %v69, 7
    %v74 = vrot.slane %v70, 7
    %v75 = vrot.slane %v71, 7
    %v76 = vrot.slane %v72, 7
    %v77 = vlaneseq
    %v78 = vshrl.u32 %v77, 7
    %vm79 = vcmp.lt.s32.totalorder %v78, 1
    %v80 = vsel %vm79, %v75, %v76
    %v81 = vsel %vm79, %v74, %v75
    %v82 = vsel %vm79, %v73, %v74
    %v83 = vsel %vm79, %v76, %v73
    %85 = vset.pattern.permute.xlu0 0
    %86 = vperm.xlu0 %85, %v55
    %v87 = vpop.permute.xlu0 %86
    %90 = vset.pattern.permute.xlu0 0
    %91 = vperm.xlu0 %90, %v56
    %v92 = vpop.permute.xlu0 %91
    %95 = vset.pattern.permute.xlu0 0
    %96 = vperm.xlu0 %95, %v57
    %v97 = vpop.permute.xlu0 %96
    %100 = vset.pattern.permute.xlu0 0
    %101 = vperm.xlu0 %100, %v58
    %v102 = vpop.permute.xlu0 %101
    %v104 = vmul.f32 %v83, %v87
    %v105 = vmul.f32 %v82, %v92
    %v106 = vmul.f32 %v81, %v97
    %v107 = vmul.f32 %v80, %v102
    %v108 = vld [vmem:[%s3] sm:$0xf]
    %s109 = scalar_lea.vmem %s3, 4
    %v110 = vld [vmem:[%s109] sm:$0xf]
    %vm111 = vcmask 31744
    %v113 = vsel %vm111, %v69, 0
    %v116 = vsel %vm111, %v70, 0
    %v119 = vsel %vm111, %v71, 0
    %v122 = vsel %vm111, %v72, 0
    %vm124 = vcmask 1043456
    %v126 = vsel %vm124, %v110, 0
    %128 = vmatprep.subr.mxu0 0.0
    %129 = vmatpush1.msra.mxu0 %v126
    %130 = vmatprep.subr.mxu0 0.0
    %131 = vmatpush1.msra.mxu0 0.0
    %132 = vmatprep.subr.mxu0 0.0
    %133 = vmatpush1.msra.mxu0 0.0
    %134 = vmatprep.subr.mxu0 0.0
    %135 = vmatpush1.msra.mxu0 0.0
    %136 = vmatprep.subr.mxu0 0.0
    %137 = vmatpush1.msra.mxu0 0.0
    %138 = vmatprep.subr.mxu0 0.0
    %139 = vmatpush1.msra.mxu0 0.0
    %140 = vmatprep.subr.mxu0 0.0
    %141 = vmatpush1.msra.mxu0 0.0
    %142 = vmatprep.subr.mxu0 0.0
    %143 = vmatpush1.msra.mxu0 0.0
    %144 = vmatprep.subr.mxu0 0.0
    %145 = vmatpush1.msra.mxu0 0.0
    %146 = vmatprep.subr.mxu0 0.0
    %147 = vmatpush1.msra.mxu0 0.0
    %148 = vmatprep.subr.mxu0 0.0
    %149 = vmatpush1.msra.mxu0 0.0
    %150 = vmatprep.subr.mxu0 0.0
    %151 = vmatpush1.msra.mxu0 0.0
    %152 = vmatprep.subr.mxu0 0.0
    %153 = vmatpush1.msra.mxu0 0.0
    %154 = vmatprep.subr.mxu0 0.0
    %155 = vmatpush1.msra.mxu0 0.0
    %156 = vmatprep.subr.mxu0 0.0
    %157 = vmatpush1.msra.mxu0 0.0
    %158 = vmatprep.subr.mxu0 0.0
    %159 = vmatpush1.msra.mxu0 0.0
    %160 = vmatprep.subr.mxu0 0.0
    %161 = vmatpush1.msra.mxu0 0.0
    %162 = vmatprep.subr.mxu0 0.0
    %163 = vmatpush1.msra.mxu0 0.0
    %164 = vmatprep.subr.mxu0 0.0
    %165 = vmatpush1.msra.mxu0 0.0
    %166 = vmatprep.subr.mxu0 0.0
    %167 = vmatpush1.msra.mxu0 0.0
    %168 = vmatprep.subr.mxu0 0.0
    %169 = vmatpush1.msra.mxu0 0.0
    %170 = vmatprep.subr.mxu0 0.0
    %171 = vmatpush1.msra.mxu0 0.0
    %172 = vmatprep.subr.mxu0 0.0
    %173 = vmatpush1.msra.mxu0 0.0
    %174 = vmatprep.subr.mxu0 0.0
    %175 = vmatpush1.msra.mxu0 0.0
    %176 = vmatprep.subr.mxu0 0.0
    %177 = vmatpush1.msra.mxu0 0.0
    %178 = vmatprep.subr.mxu0 0.0
    %179 = vmatpush1.msra.mxu0 0.0
    %180 = vmatprep.subr.mxu0 0.0
    %181 = vmatpush1.msra.mxu0 0.0
    %182 = vmatprep.subr.mxu0 0.0
    %183 = vmatpush1.msra.mxu0 0.0
    %184 = vmatprep.subr.mxu0 0.0
    %185 = vmatpush1.msra.mxu0 0.0
    %186 = vmatprep.subr.mxu0 0.0
    %187 = vmatpush1.msra.mxu0 0.0
    %188 = vmatprep.subr.mxu0 0.0
    %189 = vmatpush1.msra.mxu0 0.0
    %190 = vmatprep.subr.mxu0 0.0
    %191 = vmatpush1.msra.mxu0 0.0
    %192 = vmatprep.mubr.f32.mxu0 0.0
    %193 = vmatmul.mubr.f32.gmra.mrb[0].mxu0 %v113
    %v194 = vpop.f32.mrb[0].mxu0
    %v195 = vadd.f32 0.0, %v194
    %v196 = vpop.f32.mrb[0].mxu0
    %197 = vmatprep.mubr.f32.mxu0 0.0
    %198 = vmatmul.mubr.f32.gmra.mrb[0].mxu0 %v116
    %v199 = vpop.f32.mrb[0].mxu0
    %v200 = vadd.f32 0.0, %v199
    %v201 = vpop.f32.mrb[0].mxu0
    %202 = vmatprep.mubr.f32.mxu0 0.0
    %203 = vmatmul.mubr.f32.gmra.mrb[0].mxu0 %v119
    %v204 = vpop.f32.mrb[0].mxu0
    %v205 = vadd.f32 0.0, %v204
    %v206 = vpop.f32.mrb[0].mxu0
    %207 = vmatprep.mubr.f32.mxu0 0.0
    %208 = vmatmul.mubr.f32.gmra.mrb[0].mxu0 %v122
    %v209 = vpop.f32.mrb[0].mxu0
    %v210 = vadd.f32 0.0, %v209
    %v211 = vpop.f32.mrb[0].mxu0
    %212 = vdwg.mxu0
    %v214 = vsel %vm111, %v104, 0
    %v217 = vsel %vm111, %v105, 0
    %v220 = vsel %vm111, %v106, 0
    %v223 = vsel %vm111, %v107, 0
    %v226 = vsel %vm124, %v108, 0
    %228 = vmatprep.subr.mxu0 0.0
    %229 = vmatpush1.msra.mxu0 %v226
    %230 = vmatprep.subr.mxu0 0.0
    %231 = vmatpush1.msra.mxu0 0.0
    %232 = vmatprep.subr.mxu0 0.0
    %233 = vmatpush1.msra.mxu0 0.0
    %234 = vmatprep.subr.mxu0 0.0
    %235 = vmatpush1.msra.mxu0 0.0
    %236 = vmatprep.subr.mxu0 0.0
    %237 = vmatpush1.msra.mxu0 0.0
    %238 = vmatprep.subr.mxu0 0.0
    %239 = vmatpush1.msra.mxu0 0.0
    %240 = vmatprep.subr.mxu0 0.0
    %241 = vmatpush1.msra.mxu0 0.0
    %242 = vmatprep.subr.mxu0 0.0
    %243 = vmatpush1.msra.mxu0 0.0
    %244 = vmatprep.subr.mxu0 0.0
    %245 = vmatpush1.msra.mxu0 0.0
    %246 = vmatprep.subr.mxu0 0.0
    %247 = vmatpush1.msra.mxu0 0.0
    %248 = vmatprep.subr.mxu0 0.0
    %249 = vmatpush1.msra.mxu0 0.0
    %250 = vmatprep.subr.mxu0 0.0
    %251 = vmatpush1.msra.mxu0 0.0
    %252 = vmatprep.subr.mxu0 0.0
    %253 = vmatpush1.msra.mxu0 0.0
    %254 = vmatprep.subr.mxu0 0.0
    %255 = vmatpush1.msra.mxu0 0.0
    %256 = vmatprep.subr.mxu0 0.0
    %257 = vmatpush1.msra.mxu0 0.0
    %258 = vmatprep.subr.mxu0 0.0
    %259 = vmatpush1.msra.mxu0 0.0
    %260 = vmatprep.subr.mxu0 0.0
    %261 = vmatpush1.msra.mxu0 0.0
    %262 = vmatprep.subr.mxu0 0.0
    %263 = vmatpush1.msra.mxu0 0.0
    %264 = vmatprep.subr.mxu0 0.0
    %265 = vmatpush1.msra.mxu0 0.0
    %266 = vmatprep.subr.mxu0 0.0
    %267 = vmatpush1.msra.mxu0 0.0
    %268 = vmatprep.subr.mxu0 0.0
    %269 = vmatpush1.msra.mxu0 0.0
    %270 = vmatprep.subr.mxu0 0.0
    %271 = vmatpush1.msra.mxu0 0.0
    %272 = vmatprep.subr.mxu0 0.0
    %273 = vmatpush1.msra.mxu0 0.0
    %274 = vmatprep.subr.mxu0 0.0
    %275 = vmatpush1.msra.mxu0 0.0
    %276 = vmatprep.subr.mxu0 0.0
    %277 = vmatpush1.msra.mxu0 0.0
    %278 = vmatprep.subr.mxu0 0.0
    %279 = vmatpush1.msra.mxu0 0.0
    %280 = vmatprep.subr.mxu0 0.0
    %281 = vmatpush1.msra.mxu0 0.0
    %282 = vmatprep.subr.mxu0 0.0
    %283 = vmatpush1.msra.mxu0 0.0
    %284 = vmatprep.subr.mxu0 0.0
    %285 = vmatpush1.msra.mxu0 0.0
    %286 = vmatprep.subr.mxu0 0.0
    %287 = vmatpush1.msra.mxu0 0.0
    %288 = vmatprep.subr.mxu0 0.0
    %289 = vmatpush1.msra.mxu0 0.0
    %290 = vmatprep.subr.mxu0 0.0
    %291 = vmatpush1.msra.mxu0 0.0
    %292 = vmatprep.mubr.f32.mxu0 0.0
    %293 = vmatmul.mubr.f32.gmra.mrb[0].mxu0 %v214
    %v294 = vpop.f32.mrb[0].mxu0
    %v295 = vadd.f32 %v195, %v294
    %v296 = vpop.f32.mrb[0].mxu0
    %297 = vmatprep.mubr.f32.mxu0 0.0
    %298 = vmatmul.mubr.f32.gmra.mrb[0].mxu0 %v217
    %v299 = vpop.f32.mrb[0].mxu0
    %v300 = vadd.f32 %v200, %v299
    %v301 = vpop.f32.mrb[0].mxu0
    %302 = vmatprep.mubr.f32.mxu0 0.0
    %303 = vmatmul.mubr.f32.gmra.mrb[0].mxu0 %v220
    %v304 = vpop.f32.mrb[0].mxu0
    %v305 = vadd.f32 %v205, %v304
    %v306 = vpop.f32.mrb[0].mxu0
    %307 = vmatprep.mubr.f32.mxu0 0.0
    %308 = vmatmul.mubr.f32.gmra.mrb[0].mxu0 %v223
    %v309 = vpop.f32.mrb[0].mxu0
    %v310 = vadd.f32 %v210, %v309
    %v311 = vpop.f32.mrb[0].mxu0
    %312 = vdwg.mxu0
    %v313 = vrot.slane %v69, 1
    %v314 = vrot.slane %v70, 1
    %v315 = vrot.slane %v71, 1
    %v316 = vrot.slane %v72, 1
    %vm317 = vcmp.lt.s32.totalorder %v78, 7
    %v318 = vsel %vm317, %v315, %v316
    %v319 = vsel %vm317, %v314, %v315
    %v320 = vsel %vm317, %v313, %v314
    %v321 = vsel %vm317, %v316, %v313
    %323 = vset.pattern.permute.xlu0 0
    %324 = vperm.xlu0 %323, %v60
    %v325 = vpop.permute.xlu0 %324
    %328 = vset.pattern.permute.xlu0 0
    %329 = vperm.xlu0 %328, %v61
    %v330 = vpop.permute.xlu0 %329
    %333 = vset.pattern.permute.xlu0 0
    %334 = vperm.xlu0 %333, %v62
    %v335 = vpop.permute.xlu0 %334
    %338 = vset.pattern.permute.xlu0 0
    %339 = vperm.xlu0 %338, %v63
    %v340 = vpop.permute.xlu0 %339
    %v342 = vmul.f32 %v320, %v325
    %v343 = vmul.f32 %v319, %v330
    %v344 = vmul.f32 %v318, %v335
    %v345 = vmul.f32 %v321, %v340
    %s346 = scalar_lea.vmem %s3, 8
    %v347 = vld [vmem:[%s346] sm:$0xf]
    %v349 = vsel %vm111, %v342, 0
    %v352 = vsel %vm111, %v343, 0
    %v355 = vsel %vm111, %v344, 0
    %v358 = vsel %vm111, %v345, 0
    %v361 = vsel %vm124, %v347, 0
    %363 = vmatprep.subr.mxu0 0.0
    %364 = vmatpush1.msra.mxu0 %v361
    %365 = vmatprep.subr.mxu0 0.0
    %366 = vmatpush1.msra.mxu0 0.0
    %367 = vmatprep.subr.mxu0 0.0
    %368 = vmatpush1.msra.mxu0 0.0
    %369 = vmatprep.subr.mxu0 0.0
    %370 = vmatpush1.msra.mxu0 0.0
    %371 = vmatprep.subr.mxu0 0.0
    %372 = vmatpush1.msra.mxu0 0.0
    %373 = vmatprep.subr.mxu0 0.0
    %374 = vmatpush1.msra.mxu0 0.0
    %375 = vmatprep.subr.mxu0 0.0
    %376 = vmatpush1.msra.mxu0 0.0
    %377 = vmatprep.subr.mxu0 0.0
    %378 = vmatpush1.msra.mxu0 0.0
    %379 = vmatprep.subr.mxu0 0.0
    %380 = vmatpush1.msra.mxu0 0.0
    %381 = vmatprep.subr.mxu0 0.0
    %382 = vmatpush1.msra.mxu0 0.0
    %383 = vmatprep.subr.mxu0 0.0
    %384 = vmatpush1.msra.mxu0 0.0
    %385 = vmatprep.subr.mxu0 0.0
    %386 = vmatpush1.msra.mxu0 0.0
    %387 = vmatprep.subr.mxu0 0.0
    %388 = vmatpush1.msra.mxu0 0.0
    %389 = vmatprep.subr.mxu0 0.0
    %390 = vmatpush1.msra.mxu0 0.0
    %391 = vmatprep.subr.mxu0 0.0
    %392 = vmatpush1.msra.mxu0 0.0
    %393 = vmatprep.subr.mxu0 0.0
    %394 = vmatpush1.msra.mxu0 0.0
    %395 = vmatprep.subr.mxu0 0.0
    %396 = vmatpush1.msra.mxu0 0.0
    %397 = vmatprep.subr.mxu0 0.0
    %398 = vmatpush1.msra.mxu0 0.0
    %399 = vmatprep.subr.mxu0 0.0
    %400 = vmatpush1.msra.mxu0 0.0
    %401 = vmatprep.subr.mxu0 0.0
    %402 = vmatpush1.msra.mxu0 0.0
    %403 = vmatprep.subr.mxu0 0.0
    %404 = vmatpush1.msra.mxu0 0.0
    %405 = vmatprep.subr.mxu0 0.0
    %406 = vmatpush1.msra.mxu0 0.0
    %407 = vmatprep.subr.mxu0 0.0
    %408 = vmatpush1.msra.mxu0 0.0
    %409 = vmatprep.subr.mxu0 0.0
    %410 = vmatpush1.msra.mxu0 0.0
    %411 = vmatprep.subr.mxu0 0.0
    %412 = vmatpush1.msra.mxu0 0.0
    %413 = vmatprep.subr.mxu0 0.0
    %414 = vmatpush1.msra.mxu0 0.0
    %415 = vmatprep.subr.mxu0 0.0
    %416 = vmatpush1.msra.mxu0 0.0
    %417 = vmatprep.subr.mxu0 0.0
    %418 = vmatpush1.msra.mxu0 0.0
    %419 = vmatprep.subr.mxu0 0.0
    %420 = vmatpush1.msra.mxu0 0.0
    %421 = vmatprep.subr.mxu0 0.0
    %422 = vmatpush1.msra.mxu0 0.0
    %423 = vmatprep.subr.mxu0 0.0
    %424 = vmatpush1.msra.mxu0 0.0
    %425 = vmatprep.subr.mxu0 0.0
    %426 = vmatpush1.msra.mxu0 0.0
    %427 = vmatprep.mubr.f32.mxu0 0.0
    %428 = vmatmul.mubr.f32.gmra.mrb[0].mxu0 %v349
    %v429 = vpop.f32.mrb[0].mxu0
    %v430 = vadd.f32 0.0, %v429
    %v431 = vpop.f32.mrb[0].mxu0
    %432 = vmatprep.mubr.f32.mxu0 0.0
    %433 = vmatmul.mubr.f32.gmra.mrb[0].mxu0 %v352
    %v434 = vpop.f32.mrb[0].mxu0
    %v435 = vadd.f32 0.0, %v434
    %v436 = vpop.f32.mrb[0].mxu0
    %437 = vmatprep.mubr.f32.mxu0 0.0
    %438 = vmatmul.mubr.f32.gmra.mrb[0].mxu0 %v355
    %v439 = vpop.f32.mrb[0].mxu0
    %v440 = vadd.f32 0.0, %v439
    %v441 = vpop.f32.mrb[0].mxu0
    %442 = vmatprep.mubr.f32.mxu0 0.0
    %443 = vmatmul.mubr.f32.gmra.mrb[0].mxu0 %v358
    %v444 = vpop.f32.mrb[0].mxu0
    %v445 = vadd.f32 0.0, %v444
    %v446 = vpop.f32.mrb[0].mxu0
    %447 = vdwg.mxu0
    %v448 = vadd.f32 %v295, %v430
    %v449 = vadd.f32 %v300, %v435
    %v450 = vadd.f32 %v305, %v440
    %v451 = vadd.f32 %v310, %v445
    %v452 = vld [vmem:[%s4] sm:$0x1]
    %v454 = vlaneseq
    %v455 = vshrl.u32 %v454, 7
    %v456 = vsub.s32 0, %v455
    %v457 = vrot.slane %v452, %v456
    %v459 = vadd.f32 %v448, %v457
    %v460 = vadd.f32 %v449, %v457
    %v461 = vadd.f32 %v450, %v457
    %v462 = vadd.f32 %v451, %v457
    %v463 = vmax.f32 %v459, 0.0
    %v464 = vmax.f32 %v460, 0.0
    %v465 = vmax.f32 %v461, 0.0
    %v466 = vmax.f32 %v462, 0.0
    %v467 = vrot.slane %v463, 6
    %v468 = vrot.slane %v464, 6
    %v469 = vrot.slane %v465, 6
    %v470 = vrot.slane %v466, 6
    %vm471 = vcmp.lt.s32.totalorder %v78, 2
    %v472 = vsel %vm471, %v469, %v470
    %v473 = vsel %vm471, %v468, %v469
    %v474 = vsel %vm471, %v467, %v468
    %v475 = vsel %vm471, %v470, %v467
    %477 = vset.pattern.permute.xlu0 0
    %478 = vperm.xlu0 %477, %v50
    %v479 = vpop.permute.xlu0 %478
    %482 = vset.pattern.permute.xlu0 0
    %483 = vperm.xlu0 %482, %v51
    %v484 = vpop.permute.xlu0 %483
    %487 = vset.pattern.permute.xlu0 0
    %488 = vperm.xlu0 %487, %v52
    %v489 = vpop.permute.xlu0 %488
    %492 = vset.pattern.permute.xlu0 0
    %493 = vperm.xlu0 %492, %v53
    %v494 = vpop.permute.xlu0 %493
    %v496 = vmul.f32 %v475, %v479
    %v497 = vmul.f32 %v474, %v484
    %v498 = vmul.f32 %v473, %v489
    %v499 = vmul.f32 %v472, %v494
    %v500 = vld [vmem:[%s5] sm:$0xff]
    %v501 = vrot.slane %v463, 7
    %v502 = vrot.slane %v464, 7
    %v503 = vrot.slane %v465, 7
    %v504 = vrot.slane %v466, 7
    %v505 = vsel %vm79, %v503, %v504
    %v506 = vsel %vm79, %v502, %v503
    %v507 = vsel %vm79, %v501, %v502
    %v508 = vsel %vm79, %v504, %v501
    %v509 = vmul.f32 %v508, %v87
    %v510 = vmul.f32 %v507, %v92
    %v511 = vmul.f32 %v506, %v97
    %v512 = vmul.f32 %v505, %v102
    %s513 = scalar_lea.vmem %s5, 8
    %v514 = vld [vmem:[%s513] sm:$0xff]
    %vm515 = vcmask 64512
    %v517 = vsel %vm515, %v509, 0
    %v520 = vsel %vm515, %v510, 0
    %v523 = vsel %vm515, %v511, 0
    %v526 = vsel %vm515, %v512, 0
    %528 = vmatprep.subr.mxu0 0.0
    %529 = vmatpush1.msra.mxu0 %v514
    %530 = vmatprep.subr.mxu0 0.0
    %531 = vmatpush1.msra.mxu0 0.0
    %532 = vmatprep.subr.mxu0 0.0
    %533 = vmatpush1.msra.mxu0 0.0
    %534 = vmatprep.subr.mxu0 0.0
    %535 = vmatpush1.msra.mxu0 0.0
    %536 = vmatprep.subr.mxu0 0.0
    %537 = vmatpush1.msra.mxu0 0.0
    %538 = vmatprep.subr.mxu0 0.0
    %539 = vmatpush1.msra.mxu0 0.0
    %540 = vmatprep.subr.mxu0 0.0
    %541 = vmatpush1.msra.mxu0 0.0
    %542 = vmatprep.subr.mxu0 0.0
    %543 = vmatpush1.msra.mxu0 0.0
    %544 = vmatprep.subr.mxu0 0.0
    %545 = vmatpush1.msra.mxu0 0.0
    %546 = vmatprep.subr.mxu0 0.0
    %547 = vmatpush1.msra.mxu0 0.0
    %548 = vmatprep.subr.mxu0 0.0
    %549 = vmatpush1.msra.mxu0 0.0
    %550 = vmatprep.subr.mxu0 0.0
    %551 = vmatpush1.msra.mxu0 0.0
    %552 = vmatprep.subr.mxu0 0.0
    %553 = vmatpush1.msra.mxu0 0.0
    %554 = vmatprep.subr.mxu0 0.0
    %555 = vmatpush1.msra.mxu0 0.0
    %556 = vmatprep.subr.mxu0 0.0
    %557 = vmatpush1.msra.mxu0 0.0
    %558 = vmatprep.subr.mxu0 0.0
    %559 = vmatpush1.msra.mxu0 0.0
    %560 = vmatprep.subr.mxu0 0.0
    %561 = vmatpush1.msra.mxu0 0.0
    %562 = vmatprep.subr.mxu0 0.0
    %563 = vmatpush1.msra.mxu0 0.0
    %564 = vmatprep.subr.mxu0 0.0
    %565 = vmatpush1.msra.mxu0 0.0
    %566 = vmatprep.subr.mxu0 0.0
    %567 = vmatpush1.msra.mxu0 0.0
    %568 = vmatprep.subr.mxu0 0.0
    %569 = vmatpush1.msra.mxu0 0.0
    %570 = vmatprep.subr.mxu0 0.0
    %571 = vmatpush1.msra.mxu0 0.0
    %572 = vmatprep.subr.mxu0 0.0
    %573 = vmatpush1.msra.mxu0 0.0
    %574 = vmatprep.subr.mxu0 0.0
    %575 = vmatpush1.msra.mxu0 0.0
    %576 = vmatprep.subr.mxu0 0.0
    %577 = vmatpush1.msra.mxu0 0.0
    %578 = vmatprep.subr.mxu0 0.0
    %579 = vmatpush1.msra.mxu0 0.0
    %580 = vmatprep.subr.mxu0 0.0
    %581 = vmatpush1.msra.mxu0 0.0
    %582 = vmatprep.subr.mxu0 0.0
    %583 = vmatpush1.msra.mxu0 0.0
    %584 = vmatprep.subr.mxu0 0.0
    %585 = vmatpush1.msra.mxu0 0.0
    %586 = vmatprep.subr.mxu0 0.0
    %587 = vmatpush1.msra.mxu0 0.0
    %588 = vmatprep.subr.mxu0 0.0
    %589 = vmatpush1.msra.mxu0 0.0
    %590 = vmatprep.subr.mxu0 0.0
    %591 = vmatpush1.msra.mxu0 0.0
    %592 = vmatprep.mubr.f32.mxu0 0.0
    %593 = vmatmul.mubr.f32.gmra.mrb[0].mxu0 %v517
    %v594 = vpop.f32.mrb[0].mxu0
    %v595 = vadd.f32 0.0, %v594
    %v596 = vpop.f32.mrb[0].mxu0
    %597 = vmatprep.mubr.f32.mxu0 0.0
    %598 = vmatmul.mubr.f32.gmra.mrb[0].mxu0 %v520
    %v599 = vpop.f32.mrb[0].mxu0
    %v600 = vadd.f32 0.0, %v599
    %v601 = vpop.f32.mrb[0].mxu0
    %602 = vmatprep.mubr.f32.mxu0 0.0
    %603 = vmatmul.mubr.f32.gmra.mrb[0].mxu0 %v523
    %v604 = vpop.f32.mrb[0].mxu0
    %v605 = vadd.f32 0.0, %v604
    %v606 = vpop.f32.mrb[0].mxu0
    %607 = vmatprep.mubr.f32.mxu0 0.0
    %608 = vmatmul.mubr.f32.gmra.mrb[0].mxu0 %v526
    %v609 = vpop.f32.mrb[0].mxu0
    %v610 = vadd.f32 0.0, %v609
    %v611 = vpop.f32.mrb[0].mxu0
    %612 = vdwg.mxu0
    %v614 = vsel %vm515, %v496, 0
    %v617 = vsel %vm515, %v497, 0
    %v620 = vsel %vm515, %v498, 0
    %v623 = vsel %vm515, %v499, 0
    %625 = vmatprep.subr.mxu0 0.0
    %626 = vmatpush1.msra.mxu0 %v500
    %627 = vmatprep.subr.mxu0 0.0
    %628 = vmatpush1.msra.mxu0 0.0
    %629 = vmatprep.subr.mxu0 0.0
    %630 = vmatpush1.msra.mxu0 0.0
    %631 = vmatprep.subr.mxu0 0.0
    %632 = vmatpush1.msra.mxu0 0.0
    %633 = vmatprep.subr.mxu0 0.0
    %634 = vmatpush1.msra.mxu0 0.0
    %635 = vmatprep.subr.mxu0 0.0
    %636 = vmatpush1.msra.mxu0 0.0
    %637 = vmatprep.subr.mxu0 0.0
    %638 = vmatpush1.msra.mxu0 0.0
    %639 = vmatprep.subr.mxu0 0.0
    %640 = vmatpush1.msra.mxu0 0.0
    %641 = vmatprep.subr.mxu0 0.0
    %642 = vmatpush1.msra.mxu0 0.0
    %643 = vmatprep.subr.mxu0 0.0
    %644 = vmatpush1.msra.mxu0 0.0
    %645 = vmatprep.subr.mxu0 0.0
    %646 = vmatpush1.msra.mxu0 0.0
    %647 = vmatprep.subr.mxu0 0.0
    %648 = vmatpush1.msra.mxu0 0.0
    %649 = vmatprep.subr.mxu0 0.0
    %650 = vmatpush1.msra.mxu0 0.0
    %651 = vmatprep.subr.mxu0 0.0
    %652 = vmatpush1.msra.mxu0 0.0
    %653 = vmatprep.subr.mxu0 0.0
    %654 = vmatpush1.msra.mxu0 0.0
    %655 = vmatprep.subr.mxu0 0.0
    %656 = vmatpush1.msra.mxu0 0.0
    %657 = vmatprep.subr.mxu0 0.0
    %658 = vmatpush1.msra.mxu0 0.0
    %659 = vmatprep.subr.mxu0 0.0
    %660 = vmatpush1.msra.mxu0 0.0
    %661 = vmatprep.subr.mxu0 0.0
    %662 = vmatpush1.msra.mxu0 0.0
    %663 = vmatprep.subr.mxu0 0.0
    %664 = vmatpush1.msra.mxu0 0.0
    %665 = vmatprep.subr.mxu0 0.0
    %666 = vmatpush1.msra.mxu0 0.0
    %667 = vmatprep.subr.mxu0 0.0
    %668 = vmatpush1.msra.mxu0 0.0
    %669 = vmatprep.subr.mxu0 0.0
    %670 = vmatpush1.msra.mxu0 0.0
    %671 = vmatprep.subr.mxu0 0.0
    %672 = vmatpush1.msra.mxu0 0.0
    %673 = vmatprep.subr.mxu0 0.0
    %674 = vmatpush1.msra.mxu0 0.0
    %675 = vmatprep.subr.mxu0 0.0
    %676 = vmatpush1.msra.mxu0 0.0
    %677 = vmatprep.subr.mxu0 0.0
    %678 = vmatpush1.msra.mxu0 0.0
    %679 = vmatprep.subr.mxu0 0.0
    %680 = vmatpush1.msra.mxu0 0.0
    %681 = vmatprep.subr.mxu0 0.0
    %682 = vmatpush1.msra.mxu0 0.0
    %683 = vmatprep.subr.mxu0 0.0
    %684 = vmatpush1.msra.mxu0 0.0
    %685 = vmatprep.subr.mxu0 0.0
    %686 = vmatpush1.msra.mxu0 0.0
    %687 = vmatprep.subr.mxu0 0.0
    %688 = vmatpush1.msra.mxu0 0.0
    %689 = vmatprep.mubr.f32.mxu0 0.0
    %690 = vmatmul.mubr.f32.gmra.mrb[0].mxu0 %v614
    %v691 = vpop.f32.mrb[0].mxu0
    %v692 = vadd.f32 %v595, %v691
    %v693 = vpop.f32.mrb[0].mxu0
    %694 = vmatprep.mubr.f32.mxu0 0.0
    %695 = vmatmul.mubr.f32.gmra.mrb[0].mxu0 %v617
    %v696 = vpop.f32.mrb[0].mxu0
    %v697 = vadd.f32 %v600, %v696
    %v698 = vpop.f32.mrb[0].mxu0
    %699 = vmatprep.mubr.f32.mxu0 0.0
    %700 = vmatmul.mubr.f32.gmra.mrb[0].mxu0 %v620
    %v701 = vpop.f32.mrb[0].mxu0
    %v702 = vadd.f32 %v605, %v701
    %v703 = vpop.f32.mrb[0].mxu0
    %704 = vmatprep.mubr.f32.mxu0 0.0
    %705 = vmatmul.mubr.f32.gmra.mrb[0].mxu0 %v623
    %v706 = vpop.f32.mrb[0].mxu0
    %v707 = vadd.f32 %v610, %v706
    %v708 = vpop.f32.mrb[0].mxu0
    %709 = vdwg.mxu0
    %s710 = scalar_lea.vmem %s5, 16
    %v711 = vld [vmem:[%s710] sm:$0xff]
    %v713 = vsel %vm515, %v463, 0
    %v716 = vsel %vm515, %v464, 0
    %v719 = vsel %vm515, %v465, 0
    %v722 = vsel %vm515, %v466, 0
    %724 = vmatprep.subr.mxu0 0.0
    %725 = vmatpush1.msra.mxu0 %v711
    %726 = vmatprep.subr.mxu0 0.0
    %727 = vmatpush1.msra.mxu0 0.0
    %728 = vmatprep.subr.mxu0 0.0
    %729 = vmatpush1.msra.mxu0 0.0
    %730 = vmatprep.subr.mxu0 0.0
    %731 = vmatpush1.msra.mxu0 0.0
    %732 = vmatprep.subr.mxu0 0.0
    %733 = vmatpush1.msra.mxu0 0.0
    %734 = vmatprep.subr.mxu0 0.0
    %735 = vmatpush1.msra.mxu0 0.0
    %736 = vmatprep.subr.mxu0 0.0
    %737 = vmatpush1.msra.mxu0 0.0
    %738 = vmatprep.subr.mxu0 0.0
    %739 = vmatpush1.msra.mxu0 0.0
    %740 = vmatprep.subr.mxu0 0.0
    %741 = vmatpush1.msra.mxu0 0.0
    %742 = vmatprep.subr.mxu0 0.0
    %743 = vmatpush1.msra.mxu0 0.0
    %744 = vmatprep.subr.mxu0 0.0
    %745 = vmatpush1.msra.mxu0 0.0
    %746 = vmatprep.subr.mxu0 0.0
    %747 = vmatpush1.msra.mxu0 0.0
    %748 = vmatprep.subr.mxu0 0.0
    %749 = vmatpush1.msra.mxu0 0.0
    %750 = vmatprep.subr.mxu0 0.0
    %751 = vmatpush1.msra.mxu0 0.0
    %752 = vmatprep.subr.mxu0 0.0
    %753 = vmatpush1.msra.mxu0 0.0
    %754 = vmatprep.subr.mxu0 0.0
    %755 = vmatpush1.msra.mxu0 0.0
    %756 = vmatprep.subr.mxu0 0.0
    %757 = vmatpush1.msra.mxu0 0.0
    %758 = vmatprep.subr.mxu0 0.0
    %759 = vmatpush1.msra.mxu0 0.0
    %760 = vmatprep.subr.mxu0 0.0
    %761 = vmatpush1.msra.mxu0 0.0
    %762 = vmatprep.subr.mxu0 0.0
    %763 = vmatpush1.msra.mxu0 0.0
    %764 = vmatprep.subr.mxu0 0.0
    %765 = vmatpush1.msra.mxu0 0.0
    %766 = vmatprep.subr.mxu0 0.0
    %767 = vmatpush1.msra.mxu0 0.0
    %768 = vmatprep.subr.mxu0 0.0
    %769 = vmatpush1.msra.mxu0 0.0
    %770 = vmatprep.subr.mxu0 0.0
    %771 = vmatpush1.msra.mxu0 0.0
    %772 = vmatprep.subr.mxu0 0.0
    %773 = vmatpush1.msra.mxu0 0.0
    %774 = vmatprep.subr.mxu0 0.0
    %775 = vmatpush1.msra.mxu0 0.0
    %776 = vmatprep.subr.mxu0 0.0
    %777 = vmatpush1.msra.mxu0 0.0
    %778 = vmatprep.subr.mxu0 0.0
    %779 = vmatpush1.msra.mxu0 0.0
    %780 = vmatprep.subr.mxu0 0.0
    %781 = vmatpush1.msra.mxu0 0.0
    %782 = vmatprep.subr.mxu0 0.0
    %783 = vmatpush1.msra.mxu0 0.0
    %784 = vmatprep.subr.mxu0 0.0
    %785 = vmatpush1.msra.mxu0 0.0
    %786 = vmatprep.subr.mxu0 0.0
    %787 = vmatpush1.msra.mxu0 0.0
    %788 = vmatprep.mubr.f32.mxu0 0.0
    %789 = vmatmul.mubr.f32.gmra.mrb[0].mxu0 %v713
    %v790 = vpop.f32.mrb[0].mxu0
    %v791 = vadd.f32 0.0, %v790
    %v792 = vpop.f32.mrb[0].mxu0
    %793 = vmatprep.mubr.f32.mxu0 0.0
    %794 = vmatmul.mubr.f32.gmra.mrb[0].mxu0 %v716
    %v795 = vpop.f32.mrb[0].mxu0
    %v796 = vadd.f32 0.0, %v795
    %v797 = vpop.f32.mrb[0].mxu0
    %798 = vmatprep.mubr.f32.mxu0 0.0
    %799 = vmatmul.mubr.f32.gmra.mrb[0].mxu0 %v719
    %v800 = vpop.f32.mrb[0].mxu0
    %v801 = vadd.f32 0.0, %v800
    %v802 = vpop.f32.mrb[0].mxu0
    %803 = vmatprep.mubr.f32.mxu0 0.0
    %804 = vmatmul.mubr.f32.gmra.mrb[0].mxu0 %v722
    %v805 = vpop.f32.mrb[0].mxu0
    %v806 = vadd.f32 0.0, %v805
    %v807 = vpop.f32.mrb[0].mxu0
    %808 = vdwg.mxu0
    %v809 = vadd.f32 %v692, %v791
    %v810 = vadd.f32 %v697, %v796
    %v811 = vadd.f32 %v702, %v801
    %v812 = vadd.f32 %v707, %v806
    %v813 = vrot.slane %v463, 1
    %v814 = vrot.slane %v464, 1
    %v815 = vrot.slane %v465, 1
    %v816 = vrot.slane %v466, 1
    %v817 = vsel %vm317, %v815, %v816
    %v818 = vsel %vm317, %v814, %v815
    %v819 = vsel %vm317, %v813, %v814
    %v820 = vsel %vm317, %v816, %v813
    %v821 = vmul.f32 %v819, %v325
    %v822 = vmul.f32 %v818, %v330
    %v823 = vmul.f32 %v817, %v335
    %v824 = vmul.f32 %v820, %v340
    %s825 = scalar_lea.vmem %s5, 24
    %v826 = vld [vmem:[%s825] sm:$0xff]
    %v828 = vsel %vm515, %v821, 0
    %v831 = vsel %vm515, %v822, 0
    %v834 = vsel %vm515, %v823, 0
    %v837 = vsel %vm515, %v824, 0
    %839 = vmatprep.subr.mxu0 0.0
    %840 = vmatpush1.msra.mxu0 %v826
    %841 = vmatprep.subr.mxu0 0.0
    %842 = vmatpush1.msra.mxu0 0.0
    %843 = vmatprep.subr.mxu0 0.0
    %844 = vmatpush1.msra.mxu0 0.0
    %845 = vmatprep.subr.mxu0 0.0
    %846 = vmatpush1.msra.mxu0 0.0
    %847 = vmatprep.subr.mxu0 0.0
    %848 = vmatpush1.msra.mxu0 0.0
    %849 = vmatprep.subr.mxu0 0.0
    %850 = vmatpush1.msra.mxu0 0.0
    %851 = vmatprep.subr.mxu0 0.0
    %852 = vmatpush1.msra.mxu0 0.0
    %853 = vmatprep.subr.mxu0 0.0
    %854 = vmatpush1.msra.mxu0 0.0
    %855 = vmatprep.subr.mxu0 0.0
    %856 = vmatpush1.msra.mxu0 0.0
    %857 = vmatprep.subr.mxu0 0.0
    %858 = vmatpush1.msra.mxu0 0.0
    %859 = vmatprep.subr.mxu0 0.0
    %860 = vmatpush1.msra.mxu0 0.0
    %861 = vmatprep.subr.mxu0 0.0
    %862 = vmatpush1.msra.mxu0 0.0
    %863 = vmatprep.subr.mxu0 0.0
    %864 = vmatpush1.msra.mxu0 0.0
    %865 = vmatprep.subr.mxu0 0.0
    %866 = vmatpush1.msra.mxu0 0.0
    %867 = vmatprep.subr.mxu0 0.0
    %868 = vmatpush1.msra.mxu0 0.0
    %869 = vmatprep.subr.mxu0 0.0
    %870 = vmatpush1.msra.mxu0 0.0
    %871 = vmatprep.subr.mxu0 0.0
    %872 = vmatpush1.msra.mxu0 0.0
    %873 = vmatprep.subr.mxu0 0.0
    %874 = vmatpush1.msra.mxu0 0.0
    %875 = vmatprep.subr.mxu0 0.0
    %876 = vmatpush1.msra.mxu0 0.0
    %877 = vmatprep.subr.mxu0 0.0
    %878 = vmatpush1.msra.mxu0 0.0
    %879 = vmatprep.subr.mxu0 0.0
    %880 = vmatpush1.msra.mxu0 0.0
    %881 = vmatprep.subr.mxu0 0.0
    %882 = vmatpush1.msra.mxu0 0.0
    %883 = vmatprep.subr.mxu0 0.0
    %884 = vmatpush1.msra.mxu0 0.0
    %885 = vmatprep.subr.mxu0 0.0
    %886 = vmatpush1.msra.mxu0 0.0
    %887 = vmatprep.subr.mxu0 0.0
    %888 = vmatpush1.msra.mxu0 0.0
    %889 = vmatprep.subr.mxu0 0.0
    %890 = vmatpush1.msra.mxu0 0.0
    %891 = vmatprep.subr.mxu0 0.0
    %892 = vmatpush1.msra.mxu0 0.0
    %893 = vmatprep.subr.mxu0 0.0
    %894 = vmatpush1.msra.mxu0 0.0
    %895 = vmatprep.subr.mxu0 0.0
    %896 = vmatpush1.msra.mxu0 0.0
    %897 = vmatprep.subr.mxu0 0.0
    %898 = vmatpush1.msra.mxu0 0.0
    %899 = vmatprep.subr.mxu0 0.0
    %900 = vmatpush1.msra.mxu0 0.0
    %901 = vmatprep.subr.mxu0 0.0
    %902 = vmatpush1.msra.mxu0 0.0
    %903 = vmatprep.mubr.f32.mxu0 0.0
    %904 = vmatmul.mubr.f32.gmra.mrb[0].mxu0 %v828
    %v905 = vpop.f32.mrb[0].mxu0
    %v906 = vadd.f32 0.0, %v905
    %v907 = vpop.f32.mrb[0].mxu0
    %908 = vmatprep.mubr.f32.mxu0 0.0
    %909 = vmatmul.mubr.f32.gmra.mrb[0].mxu0 %v831
    %v910 = vpop.f32.mrb[0].mxu0
    %v911 = vadd.f32 0.0, %v910
    %v912 = vpop.f32.mrb[0].mxu0
    %913 = vmatprep.mubr.f32.mxu0 0.0
    %914 = vmatmul.mubr.f32.gmra.mrb[0].mxu0 %v834
    %v915 = vpop.f32.mrb[0].mxu0
    %v916 = vadd.f32 0.0, %v915
    %v917 = vpop.f32.mrb[0].mxu0
    %918 = vmatprep.mubr.f32.mxu0 0.0
    %919 = vmatmul.mubr.f32.gmra.mrb[0].mxu0 %v837
    %v920 = vpop.f32.mrb[0].mxu0
    %v921 = vadd.f32 0.0, %v920
    %v922 = vpop.f32.mrb[0].mxu0
    %923 = vdwg.mxu0
    %v924 = vadd.f32 %v809, %v906
    %v925 = vadd.f32 %v810, %v911
    %v926 = vadd.f32 %v811, %v916
    %v927 = vadd.f32 %v812, %v921
    %v928 = vrot.slane %v463, 2
    %v929 = vrot.slane %v464, 2
    %v930 = vrot.slane %v465, 2
    %v931 = vrot.slane %v466, 2
    %vm932 = vcmp.lt.s32.totalorder %v78, 6
    %v933 = vsel %vm932, %v930, %v931
    %v934 = vsel %vm932, %v929, %v930
    %v935 = vsel %vm932, %v928, %v929
    %v936 = vsel %vm932, %v931, %v928
    %938 = vset.pattern.permute.xlu0 0
    %939 = vperm.xlu0 %938, %v65
    %v940 = vpop.permute.xlu0 %939
    %943 = vset.pattern.permute.xlu0 0
    %944 = vperm.xlu0 %943, %v66
    %v945 = vpop.permute.xlu0 %944
    %948 = vset.pattern.permute.xlu0 0
    %949 = vperm.xlu0 %948, %v67
    %v950 = vpop.permute.xlu0 %949
    %953 = vset.pattern.permute.xlu0 0
    %954 = vperm.xlu0 %953, %v68
    %v955 = vpop.permute.xlu0 %954
    %v957 = vmul.f32 %v935, %v940
    %v958 = vmul.f32 %v934, %v945
    %v959 = vmul.f32 %v933, %v950
    %v960 = vmul.f32 %v936, %v955
    %s961 = scalar_lea.vmem %s5, 32
    %v962 = vld [vmem:[%s961] sm:$0xff]
    %v964 = vsel %vm515, %v957, 0
    %v967 = vsel %vm515, %v958, 0
    %v970 = vsel %vm515, %v959, 0
    %v973 = vsel %vm515, %v960, 0
    %975 = vmatprep.subr.mxu0 0.0
    %976 = vmatpush1.msra.mxu0 %v962
    %977 = vmatprep.subr.mxu0 0.0
    %978 = vmatpush1.msra.mxu0 0.0
    %979 = vmatprep.subr.mxu0 0.0
    %980 = vmatpush1.msra.mxu0 0.0
    %981 = vmatprep.subr.mxu0 0.0
    %982 = vmatpush1.msra.mxu0 0.0
    %983 = vmatprep.subr.mxu0 0.0
    %984 = vmatpush1.msra.mxu0 0.0
    %985 = vmatprep.subr.mxu0 0.0
    %986 = vmatpush1.msra.mxu0 0.0
    %987 = vmatprep.subr.mxu0 0.0
    %988 = vmatpush1.msra.mxu0 0.0
    %989 = vmatprep.subr.mxu0 0.0
    %990 = vmatpush1.msra.mxu0 0.0
    %991 = vmatprep.subr.mxu0 0.0
    %992 = vmatpush1.msra.mxu0 0.0
    %993 = vmatprep.subr.mxu0 0.0
    %994 = vmatpush1.msra.mxu0 0.0
    %995 = vmatprep.subr.mxu0 0.0
    %996 = vmatpush1.msra.mxu0 0.0
    %997 = vmatprep.subr.mxu0 0.0
    %998 = vmatpush1.msra.mxu0 0.0
    %999 = vmatprep.subr.mxu0 0.0
    %1000 = vmatpush1.msra.mxu0 0.0
    %1001 = vmatprep.subr.mxu0 0.0
    %1002 = vmatpush1.msra.mxu0 0.0
    %1003 = vmatprep.subr.mxu0 0.0
    %1004 = vmatpush1.msra.mxu0 0.0
    %1005 = vmatprep.subr.mxu0 0.0
    %1006 = vmatpush1.msra.mxu0 0.0
    %1007 = vmatprep.subr.mxu0 0.0
    %1008 = vmatpush1.msra.mxu0 0.0
    %1009 = vmatprep.subr.mxu0 0.0
    %1010 = vmatpush1.msra.mxu0 0.0
    %1011 = vmatprep.subr.mxu0 0.0
    %1012 = vmatpush1.msra.mxu0 0.0
    %1013 = vmatprep.subr.mxu0 0.0
    %1014 = vmatpush1.msra.mxu0 0.0
    %1015 = vmatprep.subr.mxu0 0.0
    %1016 = vmatpush1.msra.mxu0 0.0
    %1017 = vmatprep.subr.mxu0 0.0
    %1018 = vmatpush1.msra.mxu0 0.0
    %1019 = vmatprep.subr.mxu0 0.0
    %1020 = vmatpush1.msra.mxu0 0.0
    %1021 = vmatprep.subr.mxu0 0.0
    %1022 = vmatpush1.msra.mxu0 0.0
    %1023 = vmatprep.subr.mxu0 0.0
    %1024 = vmatpush1.msra.mxu0 0.0
    %1025 = vmatprep.subr.mxu0 0.0
    %1026 = vmatpush1.msra.mxu0 0.0
    %1027 = vmatprep.subr.mxu0 0.0
    %1028 = vmatpush1.msra.mxu0 0.0
    %1029 = vmatprep.subr.mxu0 0.0
    %1030 = vmatpush1.msra.mxu0 0.0
    %1031 = vmatprep.subr.mxu0 0.0
    %1032 = vmatpush1.msra.mxu0 0.0
    %1033 = vmatprep.subr.mxu0 0.0
    %1034 = vmatpush1.msra.mxu0 0.0
    %1035 = vmatprep.subr.mxu0 0.0
    %1036 = vmatpush1.msra.mxu0 0.0
    %1037 = vmatprep.subr.mxu0 0.0
    %1038 = vmatpush1.msra.mxu0 0.0
    %1039 = vmatprep.mubr.f32.mxu0 0.0
    %1040 = vmatmul.mubr.f32.gmra.mrb[0].mxu0 %v964
    %v1041 = vpop.f32.mrb[0].mxu0
    %v1042 = vadd.f32 0.0, %v1041
    %v1043 = vpop.f32.mrb[0].mxu0
    %1044 = vmatprep.mubr.f32.mxu0 0.0
    %1045 = vmatmul.mubr.f32.gmra.mrb[0].mxu0 %v967
    %v1046 = vpop.f32.mrb[0].mxu0
    %v1047 = vadd.f32 0.0, %v1046
    %v1048 = vpop.f32.mrb[0].mxu0
    %1049 = vmatprep.mubr.f32.mxu0 0.0
    %1050 = vmatmul.mubr.f32.gmra.mrb[0].mxu0 %v970
    %v1051 = vpop.f32.mrb[0].mxu0
    %v1052 = vadd.f32 0.0, %v1051
    %v1053 = vpop.f32.mrb[0].mxu0
    %1054 = vmatprep.mubr.f32.mxu0 0.0
    %1055 = vmatmul.mubr.f32.gmra.mrb[0].mxu0 %v973
    %v1056 = vpop.f32.mrb[0].mxu0
    %v1057 = vadd.f32 0.0, %v1056
    %v1058 = vpop.f32.mrb[0].mxu0
    %1059 = vdwg.mxu0
    %v1060 = vadd.f32 %v924, %v1042
    %v1061 = vadd.f32 %v925, %v1047
    %v1062 = vadd.f32 %v926, %v1052
    %v1063 = vadd.f32 %v927, %v1057
    %v1064 = vld [vmem:[%s6] sm:$0x1]
    %v1066 = vlaneseq
    %v1067 = vshrl.u32 %v1066, 7
    %v1068 = vsub.s32 0, %v1067
    %v1069 = vrot.slane %v1064, %v1068
    %v1071 = vadd.f32 %v1060, %v1069
    %v1072 = vadd.f32 %v1061, %v1069
    %v1073 = vadd.f32 %v1062, %v1069
    %v1074 = vadd.f32 %v1063, %v1069
    %v1075 = vmax.f32 %v1071, 0.0
    %v1076 = vmax.f32 %v1072, 0.0
    %v1077 = vmax.f32 %v1073, 0.0
    %v1078 = vmax.f32 %v1074, 0.0
    %v1079 = vld [vmem:[%s2] sm:$0xff]
    %v1080 = vld [vmem:[%s2 + $0x8] sm:$0xff]
    %v1081 = vld [vmem:[%s2 + $0x10] sm:$0xff]
    %v1082 = vld [vmem:[%s2 + $0x18] sm:$0xff]
    %v1083 = vrot.slane %v1079, 7
    %v1084 = vrot.slane %v1080, 7
    %v1085 = vrot.slane %v1081, 7
    %v1086 = vrot.slane %v1082, 7
    %v1087 = vsel %vm79, %v1085, %v1086
    %v1088 = vsel %vm79, %v1084, %v1085
    %v1089 = vsel %vm79, %v1083, %v1084
    %v1090 = vsel %vm79, %v1086, %v1083
    %v1091 = vmul.f32 %v1090, %v87
    %v1092 = vmul.f32 %v1089, %v92
    %v1093 = vmul.f32 %v1088, %v97
    %v1094 = vmul.f32 %v1087, %v102
    %v1095 = vld [vmem:[%s7] sm:$0xf]
    %s1096 = scalar_lea.vmem %s7, 4
    %v1097 = vld [vmem:[%s1096] sm:$0xf]
    %v1099 = vsel %vm111, %v1079, 0
    %v1102 = vsel %vm111, %v1080, 0
    %v1105 = vsel %vm111, %v1081, 0
    %v1108 = vsel %vm111, %v1082, 0
    %v1111 = vsel %vm124, %v1097, 0
    %1113 = vmatprep.subr.mxu0 0.0
    %1114 = vmatpush1.msra.mxu0 %v1111
    %1115 = vmatprep.subr.mxu0 0.0
    %1116 = vmatpush1.msra.mxu0 0.0
    %1117 = vmatprep.subr.mxu0 0.0
    %1118 = vmatpush1.msra.mxu0 0.0
    %1119 = vmatprep.subr.mxu0 0.0
    %1120 = vmatpush1.msra.mxu0 0.0
    %1121 = vmatprep.subr.mxu0 0.0
    %1122 = vmatpush1.msra.mxu0 0.0
    %1123 = vmatprep.subr.mxu0 0.0
    %1124 = vmatpush1.msra.mxu0 0.0
    %1125 = vmatprep.subr.mxu0 0.0
    %1126 = vmatpush1.msra.mxu0 0.0
    %1127 = vmatprep.subr.mxu0 0.0
    %1128 = vmatpush1.msra.mxu0 0.0
    %1129 = vmatprep.subr.mxu0 0.0
    %1130 = vmatpush1.msra.mxu0 0.0
    %1131 = vmatprep.subr.mxu0 0.0
    %1132 = vmatpush1.msra.mxu0 0.0
    %1133 = vmatprep.subr.mxu0 0.0
    %1134 = vmatpush1.msra.mxu0 0.0
    %1135 = vmatprep.subr.mxu0 0.0
    %1136 = vmatpush1.msra.mxu0 0.0
    %1137 = vmatprep.subr.mxu0 0.0
    %1138 = vmatpush1.msra.mxu0 0.0
    %1139 = vmatprep.subr.mxu0 0.0
    %1140 = vmatpush1.msra.mxu0 0.0
    %1141 = vmatprep.subr.mxu0 0.0
    %1142 = vmatpush1.msra.mxu0 0.0
    %1143 = vmatprep.subr.mxu0 0.0
    %1144 = vmatpush1.msra.mxu0 0.0
    %1145 = vmatprep.subr.mxu0 0.0
    %1146 = vmatpush1.msra.mxu0 0.0
    %1147 = vmatprep.subr.mxu0 0.0
    %1148 = vmatpush1.msra.mxu0 0.0
    %1149 = vmatprep.subr.mxu0 0.0
    %1150 = vmatpush1.msra.mxu0 0.0
    %1151 = vmatprep.subr.mxu0 0.0
    %1152 = vmatpush1.msra.mxu0 0.0
    %1153 = vmatprep.subr.mxu0 0.0
    %1154 = vmatpush1.msra.mxu0 0.0
    %1155 = vmatprep.subr.mxu0 0.0
    %1156 = vmatpush1.msra.mxu0 0.0
    %1157 = vmatprep.subr.mxu0 0.0
    %1158 = vmatpush1.msra.mxu0 0.0
    %1159 = vmatprep.subr.mxu0 0.0
    %1160 = vmatpush1.msra.mxu0 0.0
    %1161 = vmatprep.subr.mxu0 0.0
    %1162 = vmatpush1.msra.mxu0 0.0
    %1163 = vmatprep.subr.mxu0 0.0
    %1164 = vmatpush1.msra.mxu0 0.0
    %1165 = vmatprep.subr.mxu0 0.0
    %1166 = vmatpush1.msra.mxu0 0.0
    %1167 = vmatprep.subr.mxu0 0.0
    %1168 = vmatpush1.msra.mxu0 0.0
    %1169 = vmatprep.subr.mxu0 0.0
    %1170 = vmatpush1.msra.mxu0 0.0
    %1171 = vmatprep.subr.mxu0 0.0
    %1172 = vmatpush1.msra.mxu0 0.0
    %1173 = vmatprep.subr.mxu0 0.0
    %1174 = vmatpush1.msra.mxu0 0.0
    %1175 = vmatprep.subr.mxu0 0.0
    %1176 = vmatpush1.msra.mxu0 0.0
    %1177 = vmatprep.mubr.f32.mxu0 0.0
    %1178 = vmatmul.mubr.f32.gmra.mrb[0].mxu0 %v1099
    %v1179 = vpop.f32.mrb[0].mxu0
    %v1180 = vadd.f32 0.0, %v1179
    %v1181 = vpop.f32.mrb[0].mxu0
    %1182 = vmatprep.mubr.f32.mxu0 0.0
    %1183 = vmatmul.mubr.f32.gmra.mrb[0].mxu0 %v1102
    %v1184 = vpop.f32.mrb[0].mxu0
    %v1185 = vadd.f32 0.0, %v1184
    %v1186 = vpop.f32.mrb[0].mxu0
    %1187 = vmatprep.mubr.f32.mxu0 0.0
    %1188 = vmatmul.mubr.f32.gmra.mrb[0].mxu0 %v1105
    %v1189 = vpop.f32.mrb[0].mxu0
    %v1190 = vadd.f32 0.0, %v1189
    %v1191 = vpop.f32.mrb[0].mxu0
    %1192 = vmatprep.mubr.f32.mxu0 0.0
    %1193 = vmatmul.mubr.f32.gmra.mrb[0].mxu0 %v1108
    %v1194 = vpop.f32.mrb[0].mxu0
    %v1195 = vadd.f32 0.0, %v1194
    %v1196 = vpop.f32.mrb[0].mxu0
    %1197 = vdwg.mxu0
    %v1199 = vsel %vm111, %v1091, 0
    %v1202 = vsel %vm111, %v1092, 0
    %v1205 = vsel %vm111, %v1093, 0
    %v1208 = vsel %vm111, %v1094, 0
    %v1211 = vsel %vm124, %v1095, 0
    %1213 = vmatprep.subr.mxu0 0.0
    %1214 = vmatpush1.msra.mxu0 %v1211
    %1215 = vmatprep.subr.mxu0 0.0
    %1216 = vmatpush1.msra.mxu0 0.0
    %1217 = vmatprep.subr.mxu0 0.0
    %1218 = vmatpush1.msra.mxu0 0.0
    %1219 = vmatprep.subr.mxu0 0.0
    %1220 = vmatpush1.msra.mxu0 0.0
    %1221 = vmatprep.subr.mxu0 0.0
    %1222 = vmatpush1.msra.mxu0 0.0
    %1223 = vmatprep.subr.mxu0 0.0
    %1224 = vmatpush1.msra.mxu0 0.0
    %1225 = vmatprep.subr.mxu0 0.0
    %1226 = vmatpush1.msra.mxu0 0.0
    %1227 = vmatprep.subr.mxu0 0.0
    %1228 = vmatpush1.msra.mxu0 0.0
    %1229 = vmatprep.subr.mxu0 0.0
    %1230 = vmatpush1.msra.mxu0 0.0
    %1231 = vmatprep.subr.mxu0 0.0
    %1232 = vmatpush1.msra.mxu0 0.0
    %1233 = vmatprep.subr.mxu0 0.0
    %1234 = vmatpush1.msra.mxu0 0.0
    %1235 = vmatprep.subr.mxu0 0.0
    %1236 = vmatpush1.msra.mxu0 0.0
    %1237 = vmatprep.subr.mxu0 0.0
    %1238 = vmatpush1.msra.mxu0 0.0
    %1239 = vmatprep.subr.mxu0 0.0
    %1240 = vmatpush1.msra.mxu0 0.0
    %1241 = vmatprep.subr.mxu0 0.0
    %1242 = vmatpush1.msra.mxu0 0.0
    %1243 = vmatprep.subr.mxu0 0.0
    %1244 = vmatpush1.msra.mxu0 0.0
    %1245 = vmatprep.subr.mxu0 0.0
    %1246 = vmatpush1.msra.mxu0 0.0
    %1247 = vmatprep.subr.mxu0 0.0
    %1248 = vmatpush1.msra.mxu0 0.0
    %1249 = vmatprep.subr.mxu0 0.0
    %1250 = vmatpush1.msra.mxu0 0.0
    %1251 = vmatprep.subr.mxu0 0.0
    %1252 = vmatpush1.msra.mxu0 0.0
    %1253 = vmatprep.subr.mxu0 0.0
    %1254 = vmatpush1.msra.mxu0 0.0
    %1255 = vmatprep.subr.mxu0 0.0
    %1256 = vmatpush1.msra.mxu0 0.0
    %1257 = vmatprep.subr.mxu0 0.0
    %1258 = vmatpush1.msra.mxu0 0.0
    %1259 = vmatprep.subr.mxu0 0.0
    %1260 = vmatpush1.msra.mxu0 0.0
    %1261 = vmatprep.subr.mxu0 0.0
    %1262 = vmatpush1.msra.mxu0 0.0
    %1263 = vmatprep.subr.mxu0 0.0
    %1264 = vmatpush1.msra.mxu0 0.0
    %1265 = vmatprep.subr.mxu0 0.0
    %1266 = vmatpush1.msra.mxu0 0.0
    %1267 = vmatprep.subr.mxu0 0.0
    %1268 = vmatpush1.msra.mxu0 0.0
    %1269 = vmatprep.subr.mxu0 0.0
    %1270 = vmatpush1.msra.mxu0 0.0
    %1271 = vmatprep.subr.mxu0 0.0
    %1272 = vmatpush1.msra.mxu0 0.0
    %1273 = vmatprep.subr.mxu0 0.0
    %1274 = vmatpush1.msra.mxu0 0.0
    %1275 = vmatprep.subr.mxu0 0.0
    %1276 = vmatpush1.msra.mxu0 0.0
    %1277 = vmatprep.mubr.f32.mxu0 0.0
    %1278 = vmatmul.mubr.f32.gmra.mrb[0].mxu0 %v1199
    %v1279 = vpop.f32.mrb[0].mxu0
    %v1280 = vadd.f32 %v1180, %v1279
    %v1281 = vpop.f32.mrb[0].mxu0
    %1282 = vmatprep.mubr.f32.mxu0 0.0
    %1283 = vmatmul.mubr.f32.gmra.mrb[0].mxu0 %v1202
    %v1284 = vpop.f32.mrb[0].mxu0
    %v1285 = vadd.f32 %v1185, %v1284
    %v1286 = vpop.f32.mrb[0].mxu0
    %1287 = vmatprep.mubr.f32.mxu0 0.0
    %1288 = vmatmul.mubr.f32.gmra.mrb[0].mxu0 %v1205
    %v1289 = vpop.f32.mrb[0].mxu0
    %v1290 = vadd.f32 %v1190, %v1289
    %v1291 = vpop.f32.mrb[0].mxu0
    %1292 = vmatprep.mubr.f32.mxu0 0.0
    %1293 = vmatmul.mubr.f32.gmra.mrb[0].mxu0 %v1208
    %v1294 = vpop.f32.mrb[0].mxu0
    %v1295 = vadd.f32 %v1195, %v1294
    %v1296 = vpop.f32.mrb[0].mxu0
    %1297 = vdwg.mxu0
    %v1298 = vrot.slane %v1079, 1
    %v1299 = vrot.slane %v1080, 1
    %v1300 = vrot.slane %v1081, 1
    %v1301 = vrot.slane %v1082, 1
    %v1302 = vsel %vm317, %v1300, %v1301
    %v1303 = vsel %vm317, %v1299, %v1300
    %v1304 = vsel %vm317, %v1298, %v1299
    %v1305 = vsel %vm317, %v1301, %v1298
    %v1306 = vmul.f32 %v1304, %v325
    %v1307 = vmul.f32 %v1303, %v330
    %v1308 = vmul.f32 %v1302, %v335
    %v1309 = vmul.f32 %v1305, %v340
    %s1310 = scalar_lea.vmem %s7, 8
    %v1311 = vld [vmem:[%s1310] sm:$0xf]
    %v1313 = vsel %vm111, %v1306, 0
    %v1316 = vsel %vm111, %v1307, 0
    %v1319 = vsel %vm111, %v1308, 0
    %v1322 = vsel %vm111, %v1309, 0
    %v1325 = vsel %vm124, %v1311, 0
    %1327 = vmatprep.subr.mxu0 0.0
    %1328 = vmatpush1.msra.mxu0 %v1325
    %1329 = vmatprep.subr.mxu0 0.0
    %1330 = vmatpush1.msra.mxu0 0.0
    %1331 = vmatprep.subr.mxu0 0.0
    %1332 = vmatpush1.msra.mxu0 0.0
    %1333 = vmatprep.subr.mxu0 0.0
    %1334 = vmatpush1.msra.mxu0 0.0
    %1335 = vmatprep.subr.mxu0 0.0
    %1336 = vmatpush1.msra.mxu0 0.0
    %1337 = vmatprep.subr.mxu0 0.0
    %1338 = vmatpush1.msra.mxu0 0.0
    %1339 = vmatprep.subr.mxu0 0.0
    %1340 = vmatpush1.msra.mxu0 0.0
    %1341 = vmatprep.subr.mxu0 0.0
    %1342 = vmatpush1.msra.mxu0 0.0
    %1343 = vmatprep.subr.mxu0 0.0
    %1344 = vmatpush1.msra.mxu0 0.0
    %1345 = vmatprep.subr.mxu0 0.0
    %1346 = vmatpush1.msra.mxu0 0.0
    %1347 = vmatprep.subr.mxu0 0.0
    %1348 = vmatpush1.msra.mxu0 0.0
    %1349 = vmatprep.subr.mxu0 0.0
    %1350 = vmatpush1.msra.mxu0 0.0
    %1351 = vmatprep.subr.mxu0 0.0
    %1352 = vmatpush1.msra.mxu0 0.0
    %1353 = vmatprep.subr.mxu0 0.0
    %1354 = vmatpush1.msra.mxu0 0.0
    %1355 = vmatprep.subr.mxu0 0.0
    %1356 = vmatpush1.msra.mxu0 0.0
    %1357 = vmatprep.subr.mxu0 0.0
    %1358 = vmatpush1.msra.mxu0 0.0
    %1359 = vmatprep.subr.mxu0 0.0
    %1360 = vmatpush1.msra.mxu0 0.0
    %1361 = vmatprep.subr.mxu0 0.0
    %1362 = vmatpush1.msra.mxu0 0.0
    %1363 = vmatprep.subr.mxu0 0.0
    %1364 = vmatpush1.msra.mxu0 0.0
    %1365 = vmatprep.subr.mxu0 0.0
    %1366 = vmatpush1.msra.mxu0 0.0
    %1367 = vmatprep.subr.mxu0 0.0
    %1368 = vmatpush1.msra.mxu0 0.0
    %1369 = vmatprep.subr.mxu0 0.0
    %1370 = vmatpush1.msra.mxu0 0.0
    %1371 = vmatprep.subr.mxu0 0.0
    %1372 = vmatpush1.msra.mxu0 0.0
    %1373 = vmatprep.subr.mxu0 0.0
    %1374 = vmatpush1.msra.mxu0 0.0
    %1375 = vmatprep.subr.mxu0 0.0
    %1376 = vmatpush1.msra.mxu0 0.0
    %1377 = vmatprep.subr.mxu0 0.0
    %1378 = vmatpush1.msra.mxu0 0.0
    %1379 = vmatprep.subr.mxu0 0.0
    %1380 = vmatpush1.msra.mxu0 0.0
    %1381 = vmatprep.subr.mxu0 0.0
    %1382 = vmatpush1.msra.mxu0 0.0
    %1383 = vmatprep.subr.mxu0 0.0
    %1384 = vmatpush1.msra.mxu0 0.0
    %1385 = vmatprep.subr.mxu0 0.0
    %1386 = vmatpush1.msra.mxu0 0.0
    %1387 = vmatprep.subr.mxu0 0.0
    %1388 = vmatpush1.msra.mxu0 0.0
    %1389 = vmatprep.subr.mxu0 0.0
    %1390 = vmatpush1.msra.mxu0 0.0
    %1391 = vmatprep.mubr.f32.mxu0 0.0
    %1392 = vmatmul.mubr.f32.gmra.mrb[0].mxu0 %v1313
    %v1393 = vpop.f32.mrb[0].mxu0
    %v1394 = vadd.f32 0.0, %v1393
    %v1395 = vpop.f32.mrb[0].mxu0
    %1396 = vmatprep.mubr.f32.mxu0 0.0
    %1397 = vmatmul.mubr.f32.gmra.mrb[0].mxu0 %v1316
    %v1398 = vpop.f32.mrb[0].mxu0
    %v1399 = vadd.f32 0.0, %v1398
    %v1400 = vpop.f32.mrb[0].mxu0
    %1401 = vmatprep.mubr.f32.mxu0 0.0
    %1402 = vmatmul.mubr.f32.gmra.mrb[0].mxu0 %v1319
    %v1403 = vpop.f32.mrb[0].mxu0
    %v1404 = vadd.f32 0.0, %v1403
    %v1405 = vpop.f32.mrb[0].mxu0
    %1406 = vmatprep.mubr.f32.mxu0 0.0
    %1407 = vmatmul.mubr.f32.gmra.mrb[0].mxu0 %v1322
    %v1408 = vpop.f32.mrb[0].mxu0
    %v1409 = vadd.f32 0.0, %v1408
    %v1410 = vpop.f32.mrb[0].mxu0
    %1411 = vdwg.mxu0
    %v1412 = vadd.f32 %v1280, %v1394
    %v1413 = vadd.f32 %v1285, %v1399
    %v1414 = vadd.f32 %v1290, %v1404
    %v1415 = vadd.f32 %v1295, %v1409
    %v1416 = vld [vmem:[%s8] sm:$0x1]
    %v1418 = vlaneseq
    %v1419 = vshrl.u32 %v1418, 7
    %v1420 = vsub.s32 0, %v1419
    %v1421 = vrot.slane %v1416, %v1420
    %v1423 = vadd.f32 %v1412, %v1421
    %v1424 = vadd.f32 %v1413, %v1421
    %v1425 = vadd.f32 %v1414, %v1421
    %v1426 = vadd.f32 %v1415, %v1421
    %v1427 = vmax.f32 %v1423, 0.0
    %v1428 = vmax.f32 %v1424, 0.0
    %v1429 = vmax.f32 %v1425, 0.0
    %v1430 = vmax.f32 %v1426, 0.0
    %v1431 = vrot.slane %v1427, 7
    %v1432 = vrot.slane %v1428, 7
    %v1433 = vrot.slane %v1429, 7
    %v1434 = vrot.slane %v1430, 7
    %v1435 = vsel %vm79, %v1433, %v1434
    %v1436 = vsel %vm79, %v1432, %v1433
    %v1437 = vsel %vm79, %v1431, %v1432
    %v1438 = vsel %vm79, %v1434, %v1431
    %v1439 = vmul.f32 %v1438, %v87
    %v1440 = vmul.f32 %v1437, %v92
    %v1441 = vmul.f32 %v1436, %v97
    %v1442 = vmul.f32 %v1435, %v102
    %v1443 = vld [vmem:[%s9] sm:$0xff]
    %s1444 = scalar_lea.vmem %s9, 8
    %v1445 = vld [vmem:[%s1444] sm:$0xff]
    %v1447 = vsel %vm515, %v1427, 0
    %v1450 = vsel %vm515, %v1428, 0
    %v1453 = vsel %vm515, %v1429, 0
    %v1456 = vsel %vm515, %v1430, 0
    %1458 = vmatprep.subr.mxu0 0.0
    %1459 = vmatpush1.msra.mxu0 %v1445
    %1460 = vmatprep.subr.mxu0 0.0
    %1461 = vmatpush1.msra.mxu0 0.0
    %1462 = vmatprep.subr.mxu0 0.0
    %1463 = vmatpush1.msra.mxu0 0.0
    %1464 = vmatprep.subr.mxu0 0.0
    %1465 = vmatpush1.msra.mxu0 0.0
    %1466 = vmatprep.subr.mxu0 0.0
    %1467 = vmatpush1.msra.mxu0 0.0
    %1468 = vmatprep.subr.mxu0 0.0
    %1469 = vmatpush1.msra.mxu0 0.0
    %1470 = vmatprep.subr.mxu0 0.0
    %1471 = vmatpush1.msra.mxu0 0.0
    %1472 = vmatprep.subr.mxu0 0.0
    %1473 = vmatpush1.msra.mxu0 0.0
    %1474 = vmatprep.subr.mxu0 0.0
    %1475 = vmatpush1.msra.mxu0 0.0
    %1476 = vmatprep.subr.mxu0 0.0
    %1477 = vmatpush1.msra.mxu0 0.0
    %1478 = vmatprep.subr.mxu0 0.0
    %1479 = vmatpush1.msra.mxu0 0.0
    %1480 = vmatprep.subr.mxu0 0.0
    %1481 = vmatpush1.msra.mxu0 0.0
    %1482 = vmatprep.subr.mxu0 0.0
    %1483 = vmatpush1.msra.mxu0 0.0
    %1484 = vmatprep.subr.mxu0 0.0
    %1485 = vmatpush1.msra.mxu0 0.0
    %1486 = vmatprep.subr.mxu0 0.0
    %1487 = vmatpush1.msra.mxu0 0.0
    %1488 = vmatprep.subr.mxu0 0.0
    %1489 = vmatpush1.msra.mxu0 0.0
    %1490 = vmatprep.subr.mxu0 0.0
    %1491 = vmatpush1.msra.mxu0 0.0
    %1492 = vmatprep.subr.mxu0 0.0
    %1493 = vmatpush1.msra.mxu0 0.0
    %1494 = vmatprep.subr.mxu0 0.0
    %1495 = vmatpush1.msra.mxu0 0.0
    %1496 = vmatprep.subr.mxu0 0.0
    %1497 = vmatpush1.msra.mxu0 0.0
    %1498 = vmatprep.subr.mxu0 0.0
    %1499 = vmatpush1.msra.mxu0 0.0
    %1500 = vmatprep.subr.mxu0 0.0
    %1501 = vmatpush1.msra.mxu0 0.0
    %1502 = vmatprep.subr.mxu0 0.0
    %1503 = vmatpush1.msra.mxu0 0.0
    %1504 = vmatprep.subr.mxu0 0.0
    %1505 = vmatpush1.msra.mxu0 0.0
    %1506 = vmatprep.subr.mxu0 0.0
    %1507 = vmatpush1.msra.mxu0 0.0
    %1508 = vmatprep.subr.mxu0 0.0
    %1509 = vmatpush1.msra.mxu0 0.0
    %1510 = vmatprep.subr.mxu0 0.0
    %1511 = vmatpush1.msra.mxu0 0.0
    %1512 = vmatprep.subr.mxu0 0.0
    %1513 = vmatpush1.msra.mxu0 0.0
    %1514 = vmatprep.subr.mxu0 0.0
    %1515 = vmatpush1.msra.mxu0 0.0
    %1516 = vmatprep.subr.mxu0 0.0
    %1517 = vmatpush1.msra.mxu0 0.0
    %1518 = vmatprep.subr.mxu0 0.0
    %1519 = vmatpush1.msra.mxu0 0.0
    %1520 = vmatprep.subr.mxu0 0.0
    %1521 = vmatpush1.msra.mxu0 0.0
    %1522 = vmatprep.mubr.f32.mxu0 0.0
    %1523 = vmatmul.mubr.f32.gmra.mrb[0].mxu0 %v1447
    %v1524 = vpop.f32.mrb[0].mxu0
    %v1525 = vadd.f32 0.0, %v1524
    %v1526 = vpop.f32.mrb[0].mxu0
    %1527 = vmatprep.mubr.f32.mxu0 0.0
    %1528 = vmatmul.mubr.f32.gmra.mrb[0].mxu0 %v1450
    %v1529 = vpop.f32.mrb[0].mxu0
    %v1530 = vadd.f32 0.0, %v1529
    %v1531 = vpop.f32.mrb[0].mxu0
    %1532 = vmatprep.mubr.f32.mxu0 0.0
    %1533 = vmatmul.mubr.f32.gmra.mrb[0].mxu0 %v1453
    %v1534 = vpop.f32.mrb[0].mxu0
    %v1535 = vadd.f32 0.0, %v1534
    %v1536 = vpop.f32.mrb[0].mxu0
    %1537 = vmatprep.mubr.f32.mxu0 0.0
    %1538 = vmatmul.mubr.f32.gmra.mrb[0].mxu0 %v1456
    %v1539 = vpop.f32.mrb[0].mxu0
    %v1540 = vadd.f32 0.0, %v1539
    %v1541 = vpop.f32.mrb[0].mxu0
    %1542 = vdwg.mxu0
    %v1544 = vsel %vm515, %v1439, 0
    %v1547 = vsel %vm515, %v1440, 0
    %v1550 = vsel %vm515, %v1441, 0
    %v1553 = vsel %vm515, %v1442, 0
    %1555 = vmatprep.subr.mxu0 0.0
    %1556 = vmatpush1.msra.mxu0 %v1443
    %1557 = vmatprep.subr.mxu0 0.0
    %1558 = vmatpush1.msra.mxu0 0.0
    %1559 = vmatprep.subr.mxu0 0.0
    %1560 = vmatpush1.msra.mxu0 0.0
    %1561 = vmatprep.subr.mxu0 0.0
    %1562 = vmatpush1.msra.mxu0 0.0
    %1563 = vmatprep.subr.mxu0 0.0
    %1564 = vmatpush1.msra.mxu0 0.0
    %1565 = vmatprep.subr.mxu0 0.0
    %1566 = vmatpush1.msra.mxu0 0.0
    %1567 = vmatprep.subr.mxu0 0.0
    %1568 = vmatpush1.msra.mxu0 0.0
    %1569 = vmatprep.subr.mxu0 0.0
    %1570 = vmatpush1.msra.mxu0 0.0
    %1571 = vmatprep.subr.mxu0 0.0
    %1572 = vmatpush1.msra.mxu0 0.0
    %1573 = vmatprep.subr.mxu0 0.0
    %1574 = vmatpush1.msra.mxu0 0.0
    %1575 = vmatprep.subr.mxu0 0.0
    %1576 = vmatpush1.msra.mxu0 0.0
    %1577 = vmatprep.subr.mxu0 0.0
    %1578 = vmatpush1.msra.mxu0 0.0
    %1579 = vmatprep.subr.mxu0 0.0
    %1580 = vmatpush1.msra.mxu0 0.0
    %1581 = vmatprep.subr.mxu0 0.0
    %1582 = vmatpush1.msra.mxu0 0.0
    %1583 = vmatprep.subr.mxu0 0.0
    %1584 = vmatpush1.msra.mxu0 0.0
    %1585 = vmatprep.subr.mxu0 0.0
    %1586 = vmatpush1.msra.mxu0 0.0
    %1587 = vmatprep.subr.mxu0 0.0
    %1588 = vmatpush1.msra.mxu0 0.0
    %1589 = vmatprep.subr.mxu0 0.0
    %1590 = vmatpush1.msra.mxu0 0.0
    %1591 = vmatprep.subr.mxu0 0.0
    %1592 = vmatpush1.msra.mxu0 0.0
    %1593 = vmatprep.subr.mxu0 0.0
    %1594 = vmatpush1.msra.mxu0 0.0
    %1595 = vmatprep.subr.mxu0 0.0
    %1596 = vmatpush1.msra.mxu0 0.0
    %1597 = vmatprep.subr.mxu0 0.0
    %1598 = vmatpush1.msra.mxu0 0.0
    %1599 = vmatprep.subr.mxu0 0.0
    %1600 = vmatpush1.msra.mxu0 0.0
    %1601 = vmatprep.subr.mxu0 0.0
    %1602 = vmatpush1.msra.mxu0 0.0
    %1603 = vmatprep.subr.mxu0 0.0
    %1604 = vmatpush1.msra.mxu0 0.0
    %1605 = vmatprep.subr.mxu0 0.0
    %1606 = vmatpush1.msra.mxu0 0.0
    %1607 = vmatprep.subr.mxu0 0.0
    %1608 = vmatpush1.msra.mxu0 0.0
    %1609 = vmatprep.subr.mxu0 0.0
    %1610 = vmatpush1.msra.mxu0 0.0
    %1611 = vmatprep.subr.mxu0 0.0
    %1612 = vmatpush1.msra.mxu0 0.0
    %1613 = vmatprep.subr.mxu0 0.0
    %1614 = vmatpush1.msra.mxu0 0.0
    %1615 = vmatprep.subr.mxu0 0.0
    %1616 = vmatpush1.msra.mxu0 0.0
    %1617 = vmatprep.subr.mxu0 0.0
    %1618 = vmatpush1.msra.mxu0 0.0
    %1619 = vmatprep.mubr.f32.mxu0 0.0
    %1620 = vmatmul.mubr.f32.gmra.mrb[0].mxu0 %v1544
    %v1621 = vpop.f32.mrb[0].mxu0
    %v1622 = vadd.f32 %v1525, %v1621
    %v1623 = vpop.f32.mrb[0].mxu0
    %1624 = vmatprep.mubr.f32.mxu0 0.0
    %1625 = vmatmul.mubr.f32.gmra.mrb[0].mxu0 %v1547
    %v1626 = vpop.f32.mrb[0].mxu0
    %v1627 = vadd.f32 %v1530, %v1626
    %v1628 = vpop.f32.mrb[0].mxu0
    %1629 = vmatprep.mubr.f32.mxu0 0.0
    %1630 = vmatmul.mubr.f32.gmra.mrb[0].mxu0 %v1550
    %v1631 = vpop.f32.mrb[0].mxu0
    %v1632 = vadd.f32 %v1535, %v1631
    %v1633 = vpop.f32.mrb[0].mxu0
    %1634 = vmatprep.mubr.f32.mxu0 0.0
    %1635 = vmatmul.mubr.f32.gmra.mrb[0].mxu0 %v1553
    %v1636 = vpop.f32.mrb[0].mxu0
    %v1637 = vadd.f32 %v1540, %v1636
    %v1638 = vpop.f32.mrb[0].mxu0
    %1639 = vdwg.mxu0
    %v1640 = vrot.slane %v1427, 1
    %v1641 = vrot.slane %v1428, 1
    %v1642 = vrot.slane %v1429, 1
    %v1643 = vrot.slane %v1430, 1
    %v1644 = vsel %vm317, %v1642, %v1643
    %v1645 = vsel %vm317, %v1641, %v1642
    %v1646 = vsel %vm317, %v1640, %v1641
    %v1647 = vsel %vm317, %v1643, %v1640
    %v1648 = vmul.f32 %v1646, %v325
    %v1649 = vmul.f32 %v1645, %v330
    %v1650 = vmul.f32 %v1644, %v335
    %v1651 = vmul.f32 %v1647, %v340
    %s1652 = scalar_lea.vmem %s9, 16
    %v1653 = vld [vmem:[%s1652] sm:$0xff]
    %v1655 = vsel %vm515, %v1648, 0
    %v1658 = vsel %vm515, %v1649, 0
    %v1661 = vsel %vm515, %v1650, 0
    %v1664 = vsel %vm515, %v1651, 0
    %1666 = vmatprep.subr.mxu0 0.0
    %1667 = vmatpush1.msra.mxu0 %v1653
    %1668 = vmatprep.subr.mxu0 0.0
    %1669 = vmatpush1.msra.mxu0 0.0
    %1670 = vmatprep.subr.mxu0 0.0
    %1671 = vmatpush1.msra.mxu0 0.0
    %1672 = vmatprep.subr.mxu0 0.0
    %1673 = vmatpush1.msra.mxu0 0.0
    %1674 = vmatprep.subr.mxu0 0.0
    %1675 = vmatpush1.msra.mxu0 0.0
    %1676 = vmatprep.subr.mxu0 0.0
    %1677 = vmatpush1.msra.mxu0 0.0
    %1678 = vmatprep.subr.mxu0 0.0
    %1679 = vmatpush1.msra.mxu0 0.0
    %1680 = vmatprep.subr.mxu0 0.0
    %1681 = vmatpush1.msra.mxu0 0.0
    %1682 = vmatprep.subr.mxu0 0.0
    %1683 = vmatpush1.msra.mxu0 0.0
    %1684 = vmatprep.subr.mxu0 0.0
    %1685 = vmatpush1.msra.mxu0 0.0
    %1686 = vmatprep.subr.mxu0 0.0
    %1687 = vmatpush1.msra.mxu0 0.0
    %1688 = vmatprep.subr.mxu0 0.0
    %1689 = vmatpush1.msra.mxu0 0.0
    %1690 = vmatprep.subr.mxu0 0.0
    %1691 = vmatpush1.msra.mxu0 0.0
    %1692 = vmatprep.subr.mxu0 0.0
    %1693 = vmatpush1.msra.mxu0 0.0
    %1694 = vmatprep.subr.mxu0 0.0
    %1695 = vmatpush1.msra.mxu0 0.0
    %1696 = vmatprep.subr.mxu0 0.0
    %1697 = vmatpush1.msra.mxu0 0.0
    %1698 = vmatprep.subr.mxu0 0.0
    %1699 = vmatpush1.msra.mxu0 0.0
    %1700 = vmatprep.subr.mxu0 0.0
    %1701 = vmatpush1.msra.mxu0 0.0
    %1702 = vmatprep.subr.mxu0 0.0
    %1703 = vmatpush1.msra.mxu0 0.0
    %1704 = vmatprep.subr.mxu0 0.0
    %1705 = vmatpush1.msra.mxu0 0.0
    %1706 = vmatprep.subr.mxu0 0.0
    %1707 = vmatpush1.msra.mxu0 0.0
    %1708 = vmatprep.subr.mxu0 0.0
    %1709 = vmatpush1.msra.mxu0 0.0
    %1710 = vmatprep.subr.mxu0 0.0
    %1711 = vmatpush1.msra.mxu0 0.0
    %1712 = vmatprep.subr.mxu0 0.0
    %1713 = vmatpush1.msra.mxu0 0.0
    %1714 = vmatprep.subr.mxu0 0.0
    %1715 = vmatpush1.msra.mxu0 0.0
    %1716 = vmatprep.subr.mxu0 0.0
    %1717 = vmatpush1.msra.mxu0 0.0
    %1718 = vmatprep.subr.mxu0 0.0
    %1719 = vmatpush1.msra.mxu0 0.0
    %1720 = vmatprep.subr.mxu0 0.0
    %1721 = vmatpush1.msra.mxu0 0.0
    %1722 = vmatprep.subr.mxu0 0.0
    %1723 = vmatpush1.msra.mxu0 0.0
    %1724 = vmatprep.subr.mxu0 0.0
    %1725 = vmatpush1.msra.mxu0 0.0
    %1726 = vmatprep.subr.mxu0 0.0
    %1727 = vmatpush1.msra.mxu0 0.0
    %1728 = vmatprep.subr.mxu0 0.0
    %1729 = vmatpush1.msra.mxu0 0.0
    %1730 = vmatprep.mubr.f32.mxu0 0.0
    %1731 = vmatmul.mubr.f32.gmra.mrb[0].mxu0 %v1655
    %v1732 = vpop.f32.mrb[0].mxu0
    %v1733 = vadd.f32 0.0, %v1732
    %v1734 = vpop.f32.mrb[0].mxu0
    %1735 = vmatprep.mubr.f32.mxu0 0.0
    %1736 = vmatmul.mubr.f32.gmra.mrb[0].mxu0 %v1658
    %v1737 = vpop.f32.mrb[0].mxu0
    %v1738 = vadd.f32 0.0, %v1737
    %v1739 = vpop.f32.mrb[0].mxu0
    %1740 = vmatprep.mubr.f32.mxu0 0.0
    %1741 = vmatmul.mubr.f32.gmra.mrb[0].mxu0 %v1661
    %v1742 = vpop.f32.mrb[0].mxu0
    %v1743 = vadd.f32 0.0, %v1742
    %v1744 = vpop.f32.mrb[0].mxu0
    %1745 = vmatprep.mubr.f32.mxu0 0.0
    %1746 = vmatmul.mubr.f32.gmra.mrb[0].mxu0 %v1664
    %v1747 = vpop.f32.mrb[0].mxu0
    %v1748 = vadd.f32 0.0, %v1747
    %v1749 = vpop.f32.mrb[0].mxu0
    %1750 = vdwg.mxu0
    %v1751 = vadd.f32 %v1622, %v1733
    %v1752 = vadd.f32 %v1627, %v1738
    %v1753 = vadd.f32 %v1632, %v1743
    %v1754 = vadd.f32 %v1637, %v1748
    %v1755 = vld [vmem:[%s10] sm:$0x1]
    %v1757 = vlaneseq
    %v1758 = vshrl.u32 %v1757, 7
    %v1759 = vsub.s32 0, %v1758
    %v1760 = vrot.slane %v1755, %v1759
    %v1762 = vadd.f32 %v1751, %v1760
    %v1763 = vadd.f32 %v1752, %v1760
    %v1764 = vadd.f32 %v1753, %v1760
    %v1765 = vadd.f32 %v1754, %v1760
    %v1766 = vmax.f32 %v1762, 0.0
    %v1767 = vmax.f32 %v1763, 0.0
    %v1768 = vmax.f32 %v1764, 0.0
    %v1769 = vmax.f32 %v1765, 0.0
    %v1770 = vld [vmem:[%s11] sm:$0x1]
    %v1771 = vld [vmem:[%s12] sm:$0x1]
    %vm1772 = vcmask 130048
    %v1774 = vsel %vm1772, %v1771, 0
    %v1777 = vsel %vm1772, %v1766, 0
    %v1780 = vsel %vm1772, %v1767, 0
    %v1783 = vsel %vm1772, %v1768, 0
    %v1786 = vsel %vm1772, %v1769, 0
    %1788 = vmatprep.subr.mxu0 0.0
    %1789 = vmatpush1.xpose.msra.mxu0 %v1777
    %1790 = vmatprep.subr.mxu0 0.0
    %1791 = vmatpush1.xpose.msra.mxu0 %v1780
    %1792 = vmatprep.subr.mxu0 0.0
    %1793 = vmatpush1.xpose.msra.mxu0 %v1783
    %1794 = vmatprep.subr.mxu0 0.0
    %1795 = vmatpush1.xpose.msra.mxu0 %v1786
    %1796 = vmatprep.subr.mxu0 0.0
    %1797 = vmatpush1.xpose.msra.mxu0 0.0
    %1798 = vmatprep.subr.mxu0 0.0
    %1799 = vmatpush1.xpose.msra.mxu0 0.0
    %1800 = vmatprep.subr.mxu0 0.0
    %1801 = vmatpush1.xpose.msra.mxu0 0.0
    %1802 = vmatprep.subr.mxu0 0.0
    %1803 = vmatpush1.xpose.msra.mxu0 0.0
    %1804 = vmatprep.subr.mxu0 0.0
    %1805 = vmatpush1.xpose.msra.mxu0 0.0
    %1806 = vmatprep.subr.mxu0 0.0
    %1807 = vmatpush1.xpose.msra.mxu0 0.0
    %1808 = vmatprep.subr.mxu0 0.0
    %1809 = vmatpush1.xpose.msra.mxu0 0.0
    %1810 = vmatprep.subr.mxu0 0.0
    %1811 = vmatpush1.xpose.msra.mxu0 0.0
    %1812 = vmatprep.subr.mxu0 0.0
    %1813 = vmatpush1.xpose.msra.mxu0 0.0
    %1814 = vmatprep.subr.mxu0 0.0
    %1815 = vmatpush1.xpose.msra.mxu0 0.0
    %1816 = vmatprep.subr.mxu0 0.0
    %1817 = vmatpush1.xpose.msra.mxu0 0.0
    %1818 = vmatprep.subr.mxu0 0.0
    %1819 = vmatpush1.xpose.msra.mxu0 0.0
    %1820 = vmatprep.subr.mxu0 0.0
    %1821 = vmatpush1.xpose.msra.mxu0 0.0
    %1822 = vmatprep.subr.mxu0 0.0
    %1823 = vmatpush1.xpose.msra.mxu0 0.0
    %1824 = vmatprep.subr.mxu0 0.0
    %1825 = vmatpush1.xpose.msra.mxu0 0.0
    %1826 = vmatprep.subr.mxu0 0.0
    %1827 = vmatpush1.xpose.msra.mxu0 0.0
    %1828 = vmatprep.subr.mxu0 0.0
    %1829 = vmatpush1.xpose.msra.mxu0 0.0
    %1830 = vmatprep.subr.mxu0 0.0
    %1831 = vmatpush1.xpose.msra.mxu0 0.0
    %1832 = vmatprep.subr.mxu0 0.0
    %1833 = vmatpush1.xpose.msra.mxu0 0.0
    %1834 = vmatprep.subr.mxu0 0.0
    %1835 = vmatpush1.xpose.msra.mxu0 0.0
    %1836 = vmatprep.subr.mxu0 0.0
    %1837 = vmatpush1.xpose.msra.mxu0 0.0
    %1838 = vmatprep.subr.mxu0 0.0
    %1839 = vmatpush1.xpose.msra.mxu0 0.0
    %1840 = vmatprep.subr.mxu0 0.0
    %1841 = vmatpush1.xpose.msra.mxu0 0.0
    %1842 = vmatprep.subr.mxu0 0.0
    %1843 = vmatpush1.xpose.msra.mxu0 0.0
    %1844 = vmatprep.subr.mxu0 0.0
    %1845 = vmatpush1.xpose.msra.mxu0 0.0
    %1846 = vmatprep.subr.mxu0 0.0
    %1847 = vmatpush1.xpose.msra.mxu0 0.0
    %1848 = vmatprep.subr.mxu0 0.0
    %1849 = vmatpush1.xpose.msra.mxu0 0.0
    %1850 = vmatprep.subr.mxu0 0.0
    %1851 = vmatpush1.xpose.msra.mxu0 0.0
    %1852 = vmatprep.mubr.f32.mxu0 0.0
    %1853 = vmatmul.mubr.f32.gmra.mrb[0].mxu0 %v1774
    %v1854 = vpop.f32.mrb[0].mxu0
    %v1855 = vadd.f32 0.0, %v1854
    %v1856 = vpop.f32.mrb[0].mxu0
    %1857 = vdwg.mxu0
    %v1859 = vsel %vm1772, %v1770, 0
    %v1862 = vsel %vm1772, %v1075, 0
    %v1865 = vsel %vm1772, %v1076, 0
    %v1868 = vsel %vm1772, %v1077, 0
    %v1871 = vsel %vm1772, %v1078, 0
    %1873 = vmatprep.subr.mxu0 0.0
    %1874 = vmatpush1.xpose.msra.mxu0 %v1862
    %1875 = vmatprep.subr.mxu0 0.0
    %1876 = vmatpush1.xpose.msra.mxu0 %v1865
    %1877 = vmatprep.subr.mxu0 0.0
    %1878 = vmatpush1.xpose.msra.mxu0 %v1868
    %1879 = vmatprep.subr.mxu0 0.0
    %1880 = vmatpush1.xpose.msra.mxu0 %v1871
    %1881 = vmatprep.subr.mxu0 0.0
    %1882 = vmatpush1.xpose.msra.mxu0 0.0
    %1883 = vmatprep.subr.mxu0 0.0
    %1884 = vmatpush1.xpose.msra.mxu0 0.0
    %1885 = vmatprep.subr.mxu0 0.0
    %1886 = vmatpush1.xpose.msra.mxu0 0.0
    %1887 = vmatprep.subr.mxu0 0.0
    %1888 = vmatpush1.xpose.msra.mxu0 0.0
    %1889 = vmatprep.subr.mxu0 0.0
    %1890 = vmatpush1.xpose.msra.mxu0 0.0
    %1891 = vmatprep.subr.mxu0 0.0
    %1892 = vmatpush1.xpose.msra.mxu0 0.0
    %1893 = vmatprep.subr.mxu0 0.0
    %1894 = vmatpush1.xpose.msra.mxu0 0.0
    %1895 = vmatprep.subr.mxu0 0.0
    %1896 = vmatpush1.xpose.msra.mxu0 0.0
    %1897 = vmatprep.subr.mxu0 0.0
    %1898 = vmatpush1.xpose.msra.mxu0 0.0
    %1899 = vmatprep.subr.mxu0 0.0
    %1900 = vmatpush1.xpose.msra.mxu0 0.0
    %1901 = vmatprep.subr.mxu0 0.0
    %1902 = vmatpush1.xpose.msra.mxu0 0.0
    %1903 = vmatprep.subr.mxu0 0.0
    %1904 = vmatpush1.xpose.msra.mxu0 0.0
    %1905 = vmatprep.subr.mxu0 0.0
    %1906 = vmatpush1.xpose.msra.mxu0 0.0
    %1907 = vmatprep.subr.mxu0 0.0
    %1908 = vmatpush1.xpose.msra.mxu0 0.0
    %1909 = vmatprep.subr.mxu0 0.0
    %1910 = vmatpush1.xpose.msra.mxu0 0.0
    %1911 = vmatprep.subr.mxu0 0.0
    %1912 = vmatpush1.xpose.msra.mxu0 0.0
    %1913 = vmatprep.subr.mxu0 0.0
    %1914 = vmatpush1.xpose.msra.mxu0 0.0
    %1915 = vmatprep.subr.mxu0 0.0
    %1916 = vmatpush1.xpose.msra.mxu0 0.0
    %1917 = vmatprep.subr.mxu0 0.0
    %1918 = vmatpush1.xpose.msra.mxu0 0.0
    %1919 = vmatprep.subr.mxu0 0.0
    %1920 = vmatpush1.xpose.msra.mxu0 0.0
    %1921 = vmatprep.subr.mxu0 0.0
    %1922 = vmatpush1.xpose.msra.mxu0 0.0
    %1923 = vmatprep.subr.mxu0 0.0
    %1924 = vmatpush1.xpose.msra.mxu0 0.0
    %1925 = vmatprep.subr.mxu0 0.0
    %1926 = vmatpush1.xpose.msra.mxu0 0.0
    %1927 = vmatprep.subr.mxu0 0.0
    %1928 = vmatpush1.xpose.msra.mxu0 0.0
    %1929 = vmatprep.subr.mxu0 0.0
    %1930 = vmatpush1.xpose.msra.mxu0 0.0
    %1931 = vmatprep.subr.mxu0 0.0
    %1932 = vmatpush1.xpose.msra.mxu0 0.0
    %1933 = vmatprep.subr.mxu0 0.0
    %1934 = vmatpush1.xpose.msra.mxu0 0.0
    %1935 = vmatprep.subr.mxu0 0.0
    %1936 = vmatpush1.xpose.msra.mxu0 0.0
    %1937 = vmatprep.mubr.f32.mxu0 0.0
    %1938 = vmatmul.mubr.f32.gmra.mrb[0].mxu0 %v1859
    %v1939 = vpop.f32.mrb[0].mxu0
    %v1940 = vadd.f32 %v1855, %v1939
    %v1941 = vpop.f32.mrb[0].mxu0
    %1942 = vdwg.mxu0
    %v1943 = vld [vmem:[#allocation2] sm:$0x1]
    %1945 = vset.pattern.permute.xlu0 0
    %1946 = vperm.xlu0 %1945, %v1943
    %v1947 = vpop.permute.xlu0 %1946
    %v1949 = vlaneseq
    %v1950 = vshrl.u32 %v1949, 7
    %v1951 = vsub.s32 0, %v1950
    %v1952 = vrot.slane %v1947, %v1951
    %v1953 = vadd.f32 %v1940, %v1952
    %vm1954 = vcmask 253952
    %1955 = vst.msk [vmem:[#allocation3] sm:$0x1] %vm1954, %v1953
    // Predicated region
    $region58: #{tpu_custom_call.1} parent=1 // pred_check
      _
    $region59: #{tpu_custom_call.1} parent=1 // pred_check_branch
      %1957 = sbr.rel (0) target = $region61
    $region60: #{tpu_custom_call.1} parent=1 // pred_region
      %s1959 = ssub.s32 16, 16
      %1960 = vsyncadd [#allocation4], %s1959
      %s1962 = sshll.u32 [#allocation3], 4
      %s1963 = int_to_ptr.vmem [resolvable:$true] %s1962
      %1965 = dma.vmem_to_hbm [thread:$0]  %s1963, 16, %s14, [#allocation4]
    $region61: #{tpu_custom_call.1} parent=1 // pred_fallthru
      _
    // Predicated region
    $region62: #{tpu_custom_call.1} parent=1 // pred_check
      _
    $region63: #{tpu_custom_call.1} parent=1 // pred_check_branch
      %1967 = sbr.rel (0) target = $region65
    $region64: #{tpu_custom_call.1} parent=1 // pred_region
      %1968 = dma.done [#allocation4], 16
    $region65: #{tpu_custom_call.1} parent=1 // pred_fallthru
      _
    %1969 = vsyncpa [#allocation4], 1

</llo_original>
